<compile_context>
chip_gen: v5e
topology: v5e:2x2
jax: 0.10.0
libtpu: 0.0.40
codegen_flags: <defaults>
</compile_context>

<pallas_src>
import functools
import math

import jax
import jax.numpy as jnp
import numpy as np
from jax.experimental import pallas as pl
from jax.experimental.pallas import tpu as pltpu

CLAMP = 2.0  # GLOW coupling soft-clamp constant

# MXU operand dtype.  bf16 operands hit the native MXU path on v6e/v7x; set to
# jnp.float32 for exact f32 module numerics (MXU multi-pass f32 path).
MATMUL_DTYPE = jnp.bfloat16


def _glow_log_e(s):
    # TODO(synk): FrEIA's GLOWCouplingBlock default is ATAN soft-clamping
    # (clamp*0.636*atan(s/clamp)); arctan lowering on Mosaic is not guaranteed,
    # so we use the TANH clamp variant (also a FrEIA option).
    return CLAMP * jnp.tanh(s * (1.0 / CLAMP))   # mul by constant reciprocal (VPU)


# ----------------------------------------------------------------------------
# IRevNetDownsampling (FrEIA, non-legacy): pure data movement, jac = 0.
# Used only by the pure-JAX reference; the kernel path uses the combined
# pack_channel_major permutation below.
# ----------------------------------------------------------------------------
def irevnet_downsample(x):
    B, C, H, W = x.shape
    xt = jnp.transpose(x, (0, 2, 3, 1))                     # (B,H,W,C)
    xt = xt.reshape(B, H // 2, 2, W // 2, 2, C)             # (b,h2,hm,w2,wm,c)
    xt = jnp.transpose(xt, (0, 1, 3, 2, 4, 5))              # (b,h2,w2,hm,wm,c)
    xt = xt.reshape(B, H // 2, W // 2, 4 * C)
    return jnp.transpose(xt, (0, 3, 1, 2))                  # (B,4C,H/2,W/2)


# ----------------------------------------------------------------------------
# Tiling choice: samples-per-block Bt and grid size n_grp.
# ----------------------------------------------------------------------------
def _choose_tiling(B, P, *, lane_multiple=256, target_lanes=512,
                   max_lanes=1024, min_grid=2):
    """Pick (Bt, n_grp) for the (C, Bt*P) working layout.

    Performance constraints (correctness is layout-independent):
      * Bt*P a multiple of `lane_multiple` (lane-dense unmasked vst; 256 fills
        the 2x256 MXU columns on v6e/v7x; 128 would suffice on v5e).
      * Bt*P targets 512-1024 lanes when the batch is big enough (amortizes the
        ~0.35us/step overhead without blowing the vreg file -> no spills).
      * n_grp >= min_grid and even so dimension_semantics=("parallel",) shards
        the grid across v7x's two TensorCores.
    The batch is zero-padded to Bt*n_grp on the host; outputs are sliced back.
    """
    bt_unit = lane_multiple // math.gcd(P, lane_multiple)
    if bt_unit * P > max_lanes:          # huge spatial planes: 1 sample per step
        bt_unit = 1
    bt = bt_unit
    while bt * P < target_lanes and (bt + bt_unit) * P <= max_lanes:
        bt += bt_unit
    # Don't tile wider than needed to cover the batch in `min_grid` steps
    # (bounds batch-padding waste for small B).
    bt_cover = bt_unit * max(1, -(-B // (min_grid * bt_unit)))
    bt = max(bt_unit, min(bt, bt_cover))
    n_grp = max(min_grid, -(-B // bt))
    if n_grp % 2:
        n_grp += 1
    return bt, n_grp


# ----------------------------------------------------------------------------
# Single host-side relayout in / out of the kernel (squeeze + channel-major).
# ----------------------------------------------------------------------------
def pack_channel_major(x, Bt, n_grp):
    """(B, C, H, W) -> (n_grp, 4C, Bt*Hp*Wp), one combined permutation.

    Channel order matches FrEIA's IRevNetDownsampling (non-legacy backend):
    c_out = hm*2C + wm*C + c; lane index = b_local*P + h2*Wp + w2.
    """
    B, C, H, W = x.shape
    Hp, Wp = H // 2, W // 2
    Bp = Bt * n_grp
    if Bp != B:
        x = jnp.concatenate(
            [x, jnp.zeros((Bp - B,) + x.shape[1:], x.dtype)], axis=0)
    xt = x.reshape(n_grp, Bt, C, Hp, 2, Wp, 2)       # (g,bl,c,h2,hm,w2,wm)
    xt = xt.transpose(0, 4, 6, 2, 1, 3, 5)           # (g,hm,wm,c,bl,h2,w2)
    return xt.reshape(n_grp, 4 * C, Bt * Hp * Wp)


def unpack_channel_major(y_cm, B, Bt, n_grp, C, Hp, Wp):
    """(n_grp, C, Bt*P) -> (B, C, Hp, Wp) in the post-squeeze channel space."""
    y = (y_cm.reshape(n_grp, C, Bt, Hp, Wp)
             .transpose(0, 2, 1, 3, 4)
             .reshape(n_grp * Bt, C, Hp, Wp))
    return y[:B]


# ----------------------------------------------------------------------------
# Pallas kernel: the full post-squeeze FlowBlock stack for Bt samples.
# Working layout: (C, Nt) — channels on sublanes, (sample, pixel) on lanes.
# ----------------------------------------------------------------------------
def make_flow_block_kernel(depth, C, c1, matmul_dtype=jnp.float32):
    c2 = C - c1
    assert c1 == c2, "C = 2**dim * channels is even, so c1 == c2"
    assert c1 % 8 == 0, "sublane slices below assume 8-aligned channel split"
    assert depth >= 1

    def mm(w, x):
        # MXU matmul: narrow operands, f32 accumulation.
        return jnp.dot(w.astype(matmul_dtype), x.astype(matmul_dtype),
                       preferred_element_type=jnp.float32)

    def kernel(x_ref, fw0_ref, fb0_ref, fwl_ref, fwr_ref, fbd_ref,
               s2w1_ref, s2b1_ref, s2w2_ref, s2b2_ref,
               s1w1_ref, s1b1_ref, s1w2_ref, s1b2_ref,
               y_ref, jac_ref):
        x_in = x_ref[0]                                  # (C, Nt) f32
        nt = x_in.shape[-1]
        jac_acc = jnp.zeros((c1, nt), jnp.float32)       # per-lane log-det acc

        def subnet(z, w1, b1, w2, b2):
            # Single 2nd-layer matmul; s/t are free 8-aligned sublane slices.
            h = jnp.maximum(mm(w1, z) + b1, 0.0)
            out = mm(w2, h) + b2                         # (2*c1, Nt) f32
            return out[:c1, :], out[c1:, :]

        # Composite of (pre ActNorm+conv) x2 and depth-0's fused ActNorm+conv:
        # exact host-side algebra -> one C x C matmul instead of three.
        x = mm(fw0_ref[...], x_in) + fb0_ref[...]
        x1, x2 = x[:c1, :], x[c1:, :]
        y1, y2 = x1, x2

        # Static unroll is fine at small depth; for large depth switch to
        # lax.fori_loop + dynamic ref indexing to bound vreg live ranges.
        for d in range(depth):
            if d > 0:
                # Fused ActNorm+conv for pair (2+d) consuming (y1, y2) directly
                # via host-pre-split weights -> no per-depth concatenate.
                x = (mm(fwl_ref[d - 1], y1) + mm(fwr_ref[d - 1], y2)
                     + fbd_ref[d - 1])
                x1, x2 = x[:c1, :], x[c1:, :]

            s2, t2 = subnet(x2, s2w1_ref[d], s2b1_ref[d],
                            s2w2_ref[d], s2b2_ref[d])
            le2 = _glow_log_e(s2)                        # f32 elementwise / EUP
            y1 = jnp.exp(le2) * x1 + t2
            jac_acc = jac_acc + le2

            s1, t1 = subnet(y1, s1w1_ref[d], s1b1_ref[d],
                            s1w2_ref[d], s1b2_ref[d])
            le1 = _glow_log_e(s1)
            y2 = jnp.exp(le1) * x2 + t1
            jac_acc = jac_acc + le1

        # Two 8-row-aligned sublane stores; no concat materialization.
        y_ref[0, :c1, :] = y1
        y_ref[0, c1:, :] = y2
        # Single sublane reduction; per-sample cross-lane sum happens on host.
        jac_ref[0] = jnp.sum(jac_acc, axis=0, keepdims=True)

    return kernel


# ----------------------------------------------------------------------------
# Host-side parameter preprocessing: ActNorm fusion, pre-pair folding, cast.
# ----------------------------------------------------------------------------
def _prep_params(params, C, c1, depth, matmul_dtype):
    hi = jax.lax.Precision.HIGHEST
    an_s, an_b, conv_w = params['an_s'], params['an_b'], params['conv_w']

    # Fused (ActNorm -> 1x1 conv) per pair, in f32:
    #   y = W (exp(s) x + b) = (W * exp(s)) x + W b
    fw = conv_w * jnp.exp(an_s)[:, None, :]                          # (n_pairs, C, C)
    fb = jnp.einsum('noi,ni->no', conv_w, an_b, precision=hi)        # (n_pairs, C)

    # Fold pre-pair0 ∘ pre-pair1 ∘ depth-0 pair into one affine map (exact):
    #   A2(A1(A0 x)): W = W2 W1 W0, b = W2 (W1 b0 + b1) + b2
    fw0 = jnp.dot(fw[2], jnp.dot(fw[1], fw[0], precision=hi), precision=hi)
    fb0 = (jnp.dot(fw[2],
                   jnp.dot(fw[1], fb[0], precision=hi) + fb[1],
                   precision=hi) + fb[2])

    # Depth pairs d >= 1 consume the (y1, y2) pair from the previous coupling:
    # pre-split their conv weights along the input-channel (lane) axis on the
    # host so the kernel never lane-slices W.
    if depth > 1:
        fwl, fwr, fbd = fw[3:, :, :c1], fw[3:, :, c1:], fb[3:]
    else:  # unused dummies (kernel never indexes them when depth == 1)
        fwl = jnp.zeros((1, C, c1), jnp.float32)
        fwr = jnp.zeros((1, C, C - c1), jnp.float32)
        fbd = jnp.zeros((1, C), jnp.float32)

    def wcast(a):
        return a.astype(matmul_dtype)

    def bcol(a):
        return a[..., None].astype(jnp.float32)      # (..., Cout, 1)

    return dict(
        fw0=wcast(fw0), fb0=bcol(fb0),
        fwl=wcast(fwl), fwr=wcast(fwr), fbd=bcol(fbd),
        s2w1=wcast(params['s2w1']), s2b1=bcol(params['s2b1']),
        s2w2=wcast(params['s2w2']), s2b2=bcol(params['s2b2']),
        s1w1=wcast(params['s1w1']), s1b1=bcol(params['s1b1']),
        s1w2=wcast(params['s1w2']), s1b2=bcol(params['s1b2']),
    )


PARAM_ORDER = ['fw0', 'fb0', 'fwl', 'fwr', 'fbd',
               's2w1', 's2b1', 's2w2', 's2b2',
               's1w1', 's1b1', 's1w2', 's1b2']


# ----------------------------------------------------------------------------
# Explicit VMEM budget (v7x: 64 MiB physical / 32 MiB scoped default;
# v5e scoped default 16 MiB).
# ----------------------------------------------------------------------------
def _vmem_limit_bytes(C, Nt, hidden, param_args):
    f32 = 4
    io_blocks = 2 * (C * Nt + C * Nt + Nt) * f32        # double-buffered x/y/jac blocks
    param_bytes = sum(int(np.prod(a.shape)) * a.dtype.itemsize for a in param_args)
    # Rough per-depth-step live set (x, x1/x2, y1/y2, hidden, s/t, jac_acc), f32.
    temps = (2 * C + 4 * (C // 2) + hidden + 2 * (C // 2) + (C // 2)) * Nt * f32
    need = io_blocks + param_bytes + temps
    limit = min(48 * 1024 * 1024, max(16 * 1024 * 1024, 4 * need))
    assert need < limit, (
        "VMEM budget exceeded; reduce Bt/Nt or hidden/depth", need, limit)
    return int(limit)


# ----------------------------------------------------------------------------
# Wrapper: glue (pack/unpack, padding), kernel call, parameter-only jacobians.
# ----------------------------------------------------------------------------
def flow_block_forward(x, logdet, params, depth, matmul_dtype=MATMUL_DTYPE):
    B, Cin, H, W = x.shape
    C = 4 * Cin                                          # post-squeeze channels
    Hp, Wp = H // 2, W // 2
    P = Hp * Wp
    c1 = C // 2
    hidden = params['s2w1'].shape[1]

    Bt, n_grp = _choose_tiling(B, P)
    Nt = Bt * P                                          # lane width per block

    # Squeeze + channel-major packing as one host-side permutation (jac = 0).
    x_cm = pack_channel_major(x, Bt, n_grp)              # (n_grp, C, Nt)

    pp = _prep_params(params, C, c1, depth, matmul_dtype)
    param_args = [pp[n] for n in PARAM_ORDER]
    kernel = make_flow_block_kernel(depth, C, c1, matmul_dtype=matmul_dtype)

    # Constant params: whole array resident in VMEM once (no per-step
    # double-buffered re-fetch).
    param_spec = pl.BlockSpec(memory_space=pltpu.MemorySpace.VMEM)
    vmem_limit = _vmem_limit_bytes(C, Nt, hidden, param_args)

    y_cm, jac_lane = pl.pallas_call(
        kernel,
        grid=(n_grp,),
        in_specs=[pl.BlockSpec((1, C, Nt), lambda g: (g, 0, 0))]
                 + [param_spec] * len(param_args),
        out_specs=[pl.BlockSpec((1, C, Nt), lambda g: (g, 0, 0)),
                   pl.BlockSpec((1, 1, Nt), lambda g: (g, 0, 0))],
        out_shape=[jax.ShapeDtypeStruct((n_grp, C, Nt), jnp.float32),
                   jax.ShapeDtypeStruct((n_grp, 1, Nt), jnp.float32)],
        compiler_params=pltpu.CompilerParams(
            dimension_semantics=("parallel",),       # shards across v7x's 2 TCs
            vmem_limit_bytes=vmem_limit),
    )(x_cm, *param_args)

    # Per-sample coupling log-det: sum each sample's lane segment on the host.
    coupling_jac = jac_lane.reshape(n_grp * Bt, P).sum(axis=-1)[:B]

    # Data-independent log-jacobians (ActNorm and invertible 1x1 convs), from
    # raw params.  slogdet has no Pallas equivalent; it stays in JAX.
    an_jac = P * jnp.sum(params['an_s'])
    conv_jac = P * jnp.sum(jnp.linalg.slogdet(params['conv_w'])[1])
    logdet_out = logdet + coupling_jac + an_jac + conv_jac

    y = unpack_channel_major(y_cm, B, Bt, n_grp, C, Hp, Wp)
    return y, logdet_out


# ----------------------------------------------------------------------------
# Deterministic parameter init (shapes implied by the module's __init__).
# ----------------------------------------------------------------------------
def init_params(key, channels, depth, hidden):
    C = 4 * channels                   # 2**dim * channels, dim = 2
    c1 = C // 2
    c2 = C - c1
    n_pairs = 2 + depth
    keys = iter(jax.random.split(key, 4 + n_pairs + 8 * depth))

    an_s = 0.1 * jax.random.normal(next(keys), (n_pairs, C), jnp.float32)
    an_b = 0.1 * jax.random.normal(next(keys), (n_pairs, C), jnp.float32)
    conv_w = jnp.stack([
        jnp.linalg.qr(jax.random.normal(next(keys), (C, C), jnp.float32))[0]
        for _ in range(n_pairs)])

    def dense(k, cout, cin, scale=0.1):
        return scale * jax.random.normal(k, (cout, cin), jnp.float32)

    s2w1 = jnp.stack([dense(next(keys), hidden, c2) for _ in range(depth)])
    s2b1 = jnp.stack([0.05 * jax.random.normal(next(keys), (hidden,), jnp.float32)
                      for _ in range(depth)])
    s2w2 = jnp.stack([dense(next(keys), 2 * c1, hidden) for _ in range(depth)])
    s2b2 = jnp.stack([0.05 * jax.random.normal(next(keys), (2 * c1,), jnp.float32)
                      for _ in range(depth)])
    s1w1 = jnp.stack([dense(next(keys), hidden, c1) for _ in range(depth)])
    s1b1 = jnp.stack([0.05 * jax.random.normal(next(keys), (hidden,), jnp.float32)
                      for _ in range(depth)])
    s1w2 = jnp.stack([dense(next(keys), 2 * c2, hidden) for _ in range(depth)])
    s1b2 = jnp.stack([0.05 * jax.random.normal(next(keys), (2 * c2,), jnp.float32)
                      for _ in range(depth)])

    return dict(an_s=an_s, an_b=an_b, conv_w=conv_w,
                s2w1=s2w1, s2b1=s2b1, s2w2=s2w2, s2b2=s2b2,
                s1w1=s1w1, s1b1=s1b1, s1w2=s1w2, s1b2=s1b2)


# ----------------------------------------------------------------------------
# Pure-JAX reference: faithful layer-by-layer module math, f32 HIGHEST.
# ----------------------------------------------------------------------------
def reference_forward(x, logdet, params, depth):
    hds = irevnet_downsample(x)
    B, C, Hp, Wp = hds.shape
    P = Hp * Wp
    c1 = C // 2
    c2 = C - c1
    xp = jnp.transpose(hds, (0, 2, 3, 1)).reshape(B, P, C)
    ld = logdet
    hi = jax.lax.Precision.HIGHEST
    ein = functools.partial(jnp.einsum, precision=hi)

    def actnorm(xp, i):
        s = params['an_s'][i]
        return xp * jnp.exp(s) + params['an_b'][i], P * jnp.sum(s)

    def conv(xp, i):
        W = params['conv_w'][i]
        return ein('bpi,oi->bpo', xp, W), P * jnp.linalg.slogdet(W)[1]

    def subnet(z, w1, b1, w2, b2):
        h = jnp.maximum(ein('bpi,hi->bph', z, w1) + b1, 0.0)
        return ein('bph,oh->bpo', h, w2) + b2

    for i in range(2):
        xp, j = actnorm(xp, i); ld = ld + j
        xp, j = conv(xp, i); ld = ld + j
    for d in range(depth):
        xp, j = actnorm(xp, 2 + d); ld = ld + j
        xp, j = conv(xp, 2 + d); ld = ld + j
        x1, x2 = xp[:, :, :c1], xp[:, :, c1:]
        r2 = subnet(x2, params['s2w1'][d], params['s2b1'][d],
                    params['s2w2'][d], params['s2b2'][d])
        s2, t2 = r2[:, :, :c1], r2[:, :, c1:]
        le2 = _glow_log_e(s2)
        y1 = jnp.exp(le2) * x1 + t2
        r1 = subnet(y1, params['s1w1'][d], params['s1b1'][d],
                    params['s1w2'][d], params['s1b2'][d])
        s1, t1 = r1[:, :, :c2], r1[:, :, c2:]
        le1 = _glow_log_e(s1)
        y2 = jnp.exp(le1) * x2 + t1
        ld = ld + jnp.sum(le2, axis=(1, 2)) + jnp.sum(le1, axis=(1, 2))
        xp = jnp.concatenate([y1, y2], axis=2)
    y = jnp.transpose(xp.reshape(B, Hp, Wp, C), (0, 3, 1, 2))
    return y, ld


if __name__ == "__main__":
    B, channels, H, W = 2, 4, 16, 16
    depth, hidden = 2, 32

    key = jax.random.PRNGKey(0)
    kx, kp = jax.random.split(key)
    x = jax.random.normal(kx, (B, channels, H, W), jnp.float32)
    logdet = jnp.zeros((B,), jnp.float32)
    params = init_params(kp, channels, depth, hidden)

    fwd = jax.jit(functools.partial(flow_block_forward, depth=depth))
    y, ld = fwd(x, logdet, params)
    jax.block_until_ready((y, ld))

    assert y.shape == (B, 4 * channels, H // 2, W // 2)
    assert ld.shape == (B,)

    y_ref, ld_ref = reference_forward(x, logdet, params, depth)

    if MATMUL_DTYPE == jnp.float32:
        y_tol = dict(rtol=1e-3, atol=1e-3)
        ld_tol = dict(rtol=1e-3, atol=1e-3)
    else:
        # bf16 MXU operands (f32 accumulation / f32 elementwise) vs all-f32
        # reference: a few 1e-3 drift per matmul, chained over the conv layers
        # and couplings; the log-det sums ~P*C terms.
        y_tol = dict(rtol=5e-2, atol=5e-2)
        ld_tol = dict(rtol=5e-2, atol=1.0)

    np.testing.assert_allclose(np.asarray(y), np.asarray(y_ref), **y_tol)
    np.testing.assert_allclose(np.asarray(ld), np.asarray(ld_ref), **ld_tol)

    print("KERNEL_OK")
</pallas_src>

<mosaic_0001>
module attributes {stable_mosaic.version = 11 : i64} {
  func.func @kernel(%arg0: i32, %arg1: memref<1x16x256xf32, #tpu.memory_space<vmem>>, %arg2: memref<16x16xbf16, #tpu.memory_space<vmem>>, %arg3: memref<16x1xf32, #tpu.memory_space<vmem>>, %arg4: memref<1x16x8xbf16, #tpu.memory_space<vmem>>, %arg5: memref<1x16x8xbf16, #tpu.memory_space<vmem>>, %arg6: memref<1x16x1xf32, #tpu.memory_space<vmem>>, %arg7: memref<2x32x8xbf16, #tpu.memory_space<vmem>>, %arg8: memref<2x32x1xf32, #tpu.memory_space<vmem>>, %arg9: memref<2x16x32xbf16, #tpu.memory_space<vmem>>, %arg10: memref<2x16x1xf32, #tpu.memory_space<vmem>>, %arg11: memref<2x32x8xbf16, #tpu.memory_space<vmem>>, %arg12: memref<2x32x1xf32, #tpu.memory_space<vmem>>, %arg13: memref<2x16x32xbf16, #tpu.memory_space<vmem>>, %arg14: memref<2x16x1xf32, #tpu.memory_space<vmem>>, %arg15: memref<1x16x256xf32, #tpu.memory_space<vmem>>, %arg16: memref<1x1x256xf32, #tpu.memory_space<vmem>>) attributes {dimension_semantics = [#tpu.dimension_semantics<parallel>], iteration_bounds = array<i64: 2>, scalar_prefetch = 0 : i64, scratch_operands = 0 : i64, tpu.core_type = #tpu.core_type<tc>, window_params = [{transform_indices = @transform_0, window_bounds = array<i64: 1, 16, 256>}, {pipeline_mode = #tpu.pipeline_mode<synchronous>, transform_indices = @transform_1, window_bounds = array<i64: 16, 16>}, {pipeline_mode = #tpu.pipeline_mode<synchronous>, transform_indices = @transform_2, window_bounds = array<i64: 16, 1>}, {pipeline_mode = #tpu.pipeline_mode<synchronous>, transform_indices = @transform_3, window_bounds = array<i64: 1, 16, 8>}, {pipeline_mode = #tpu.pipeline_mode<synchronous>, transform_indices = @transform_4, window_bounds = array<i64: 1, 16, 8>}, {pipeline_mode = #tpu.pipeline_mode<synchronous>, transform_indices = @transform_5, window_bounds = array<i64: 1, 16, 1>}, {pipeline_mode = #tpu.pipeline_mode<synchronous>, transform_indices = @transform_6, window_bounds = array<i64: 2, 32, 8>}, {pipeline_mode = #tpu.pipeline_mode<synchronous>, transform_indices = @transform_7, window_bounds = array<i64: 2, 32, 1>}, {pipeline_mode = #tpu.pipeline_mode<synchronous>, transform_indices = @transform_8, window_bounds = array<i64: 2, 16, 32>}, {pipeline_mode = #tpu.pipeline_mode<synchronous>, transform_indices = @transform_9, window_bounds = array<i64: 2, 16, 1>}, {pipeline_mode = #tpu.pipeline_mode<synchronous>, transform_indices = @transform_10, window_bounds = array<i64: 2, 32, 8>}, {pipeline_mode = #tpu.pipeline_mode<synchronous>, transform_indices = @transform_11, window_bounds = array<i64: 2, 32, 1>}, {pipeline_mode = #tpu.pipeline_mode<synchronous>, transform_indices = @transform_12, window_bounds = array<i64: 2, 16, 32>}, {pipeline_mode = #tpu.pipeline_mode<synchronous>, transform_indices = @transform_13, window_bounds = array<i64: 2, 16, 1>}, {transform_indices = @transform_14, window_bounds = array<i64: 1, 16, 256>}, {transform_indices = @transform_15, window_bounds = array<i64: 1, 1, 256>}]} {
    %c0 = arith.constant 0 : index
    %c0_0 = arith.constant 0 : index
    %c0_1 = arith.constant 0 : index
    %0 = vector.load %arg1[%c0, %c0_0, %c0_1] : memref<1x16x256xf32, #tpu.memory_space<vmem>>, vector<1x16x256xf32>
    %1 = vector.shape_cast %0 : vector<1x16x256xf32> to vector<16x256xf32>
    %cst = arith.constant 0.000000e+00 : f32
    %2 = vector.broadcast %cst : f32 to vector<8x256xf32>
    %c0_2 = arith.constant 0 : index
    %c0_3 = arith.constant 0 : index
    %3 = vector.load %arg2[%c0_2, %c0_3] : memref<16x16xbf16, #tpu.memory_space<vmem>>, vector<16x16xbf16>
    %4 = arith.truncf %1 : vector<16x256xf32> to vector<16x256xbf16>
    %cst_4 = arith.constant dense<0.000000e+00> : vector<16x256xf32>
    %5 = tpu.matmul %3, %4, %cst_4 {dimension_numbers = #tpu.dot_dimension_numbers<[1], [0], [0], [1], [0, 0, 1, 1], [], []>} : vector<16x16xbf16>, vector<16x256xbf16>, vector<16x256xf32> -> vector<16x256xf32>
    %c0_5 = arith.constant 0 : index
    %c0_6 = arith.constant 0 : index
    %6 = vector.load %arg3[%c0_5, %c0_6] : memref<16x1xf32, #tpu.memory_space<vmem>>, vector<16x1xf32>
    %7 = vector.broadcast %6 : vector<16x1xf32> to vector<16x256xf32>
    %8 = arith.addf %5, %7 : vector<16x256xf32>
    %9 = vector.extract_strided_slice %8 {offsets = [0, 0], sizes = [8, 256], strides = [1, 1]} : vector<16x256xf32> to vector<8x256xf32>
    %10 = vector.extract_strided_slice %8 {offsets = [8, 0], sizes = [8, 256], strides = [1, 1]} : vector<16x256xf32> to vector<8x256xf32>
    %c0_7 = arith.constant 0 : index
    %c0_8 = arith.constant 0 : index
    %c0_9 = arith.constant 0 : index
    %11 = vector.load %arg7[%c0_7, %c0_8, %c0_9] : memref<2x32x8xbf16, #tpu.memory_space<vmem>>, vector<1x32x8xbf16>
    %12 = vector.shape_cast %11 : vector<1x32x8xbf16> to vector<32x8xbf16>
    %c0_10 = arith.constant 0 : index
    %c0_11 = arith.constant 0 : index
    %c0_12 = arith.constant 0 : index
    %13 = vector.load %arg8[%c0_10, %c0_11, %c0_12] : memref<2x32x1xf32, #tpu.memory_space<vmem>>, vector<1x32x1xf32>
    %14 = vector.shape_cast %13 : vector<1x32x1xf32> to vector<32x1xf32>
    %c0_13 = arith.constant 0 : index
    %c0_14 = arith.constant 0 : index
    %c0_15 = arith.constant 0 : index
    %15 = vector.load %arg9[%c0_13, %c0_14, %c0_15] : memref<2x16x32xbf16, #tpu.memory_space<vmem>>, vector<1x16x32xbf16>
    %16 = vector.shape_cast %15 : vector<1x16x32xbf16> to vector<16x32xbf16>
    %c0_16 = arith.constant 0 : index
    %c0_17 = arith.constant 0 : index
    %c0_18 = arith.constant 0 : index
    %17 = vector.load %arg10[%c0_16, %c0_17, %c0_18] : memref<2x16x1xf32, #tpu.memory_space<vmem>>, vector<1x16x1xf32>
    %18 = vector.shape_cast %17 : vector<1x16x1xf32> to vector<16x1xf32>
    %19 = arith.truncf %10 : vector<8x256xf32> to vector<8x256xbf16>
    %cst_19 = arith.constant dense<0.000000e+00> : vector<32x256xf32>
    %20 = tpu.matmul %12, %19, %cst_19 {dimension_numbers = #tpu.dot_dimension_numbers<[1], [0], [0], [1], [0, 0, 1, 1], [], []>} : vector<32x8xbf16>, vector<8x256xbf16>, vector<32x256xf32> -> vector<32x256xf32>
    %21 = vector.broadcast %14 : vector<32x1xf32> to vector<32x256xf32>
    %22 = arith.addf %20, %21 : vector<32x256xf32>
    %cst_20 = arith.constant 0.000000e+00 : f32
    %23 = vector.broadcast %cst_20 : f32 to vector<32x256xf32>
    %24 = arith.maximumf %22, %23 : vector<32x256xf32>
    %25 = arith.truncf %24 : vector<32x256xf32> to vector<32x256xbf16>
    %cst_21 = arith.constant dense<0.000000e+00> : vector<16x256xf32>
    %26 = tpu.matmul %16, %25, %cst_21 {dimension_numbers = #tpu.dot_dimension_numbers<[1], [0], [0], [1], [0, 0, 1, 1], [], []>} : vector<16x32xbf16>, vector<32x256xbf16>, vector<16x256xf32> -> vector<16x256xf32>
    %27 = vector.broadcast %18 : vector<16x1xf32> to vector<16x256xf32>
    %28 = arith.addf %26, %27 : vector<16x256xf32>
    %29 = vector.extract_strided_slice %28 {offsets = [0, 0], sizes = [8, 256], strides = [1, 1]} : vector<16x256xf32> to vector<8x256xf32>
    %30 = vector.extract_strided_slice %28 {offsets = [8, 0], sizes = [8, 256], strides = [1, 1]} : vector<16x256xf32> to vector<8x256xf32>
    %cst_22 = arith.constant 5.000000e-01 : f32
    %31 = vector.broadcast %cst_22 : f32 to vector<8x256xf32>
    %32 = arith.mulf %29, %31 : vector<8x256xf32>
    %33 = math.tanh %32 : vector<8x256xf32>
    %cst_23 = arith.constant 2.000000e+00 : f32
    %34 = vector.broadcast %cst_23 : f32 to vector<8x256xf32>
    %35 = arith.mulf %34, %33 : vector<8x256xf32>
    %36 = math.exp %35 : vector<8x256xf32>
    %37 = arith.mulf %36, %9 : vector<8x256xf32>
    %38 = arith.addf %37, %30 : vector<8x256xf32>
    %39 = arith.addf %2, %35 : vector<8x256xf32>
    %c0_24 = arith.constant 0 : index
    %c0_25 = arith.constant 0 : index
    %c0_26 = arith.constant 0 : index
    %40 = vector.load %arg11[%c0_24, %c0_25, %c0_26] : memref<2x32x8xbf16, #tpu.memory_space<vmem>>, vector<1x32x8xbf16>
    %41 = vector.shape_cast %40 : vector<1x32x8xbf16> to vector<32x8xbf16>
    %c0_27 = arith.constant 0 : index
    %c0_28 = arith.constant 0 : index
    %c0_29 = arith.constant 0 : index
    %42 = vector.load %arg12[%c0_27, %c0_28, %c0_29] : memref<2x32x1xf32, #tpu.memory_space<vmem>>, vector<1x32x1xf32>
    %43 = vector.shape_cast %42 : vector<1x32x1xf32> to vector<32x1xf32>
    %c0_30 = arith.constant 0 : index
    %c0_31 = arith.constant 0 : index
    %c0_32 = arith.constant 0 : index
    %44 = vector.load %arg13[%c0_30, %c0_31, %c0_32] : memref<2x16x32xbf16, #tpu.memory_space<vmem>>, vector<1x16x32xbf16>
    %45 = vector.shape_cast %44 : vector<1x16x32xbf16> to vector<16x32xbf16>
    %c0_33 = arith.constant 0 : index
    %c0_34 = arith.constant 0 : index
    %c0_35 = arith.constant 0 : index
    %46 = vector.load %arg14[%c0_33, %c0_34, %c0_35] : memref<2x16x1xf32, #tpu.memory_space<vmem>>, vector<1x16x1xf32>
    %47 = vector.shape_cast %46 : vector<1x16x1xf32> to vector<16x1xf32>
    %48 = arith.truncf %38 : vector<8x256xf32> to vector<8x256xbf16>
    %cst_36 = arith.constant dense<0.000000e+00> : vector<32x256xf32>
    %49 = tpu.matmul %41, %48, %cst_36 {dimension_numbers = #tpu.dot_dimension_numbers<[1], [0], [0], [1], [0, 0, 1, 1], [], []>} : vector<32x8xbf16>, vector<8x256xbf16>, vector<32x256xf32> -> vector<32x256xf32>
    %50 = vector.broadcast %43 : vector<32x1xf32> to vector<32x256xf32>
    %51 = arith.addf %49, %50 : vector<32x256xf32>
    %cst_37 = arith.constant 0.000000e+00 : f32
    %52 = vector.broadcast %cst_37 : f32 to vector<32x256xf32>
    %53 = arith.maximumf %51, %52 : vector<32x256xf32>
    %54 = arith.truncf %53 : vector<32x256xf32> to vector<32x256xbf16>
    %cst_38 = arith.constant dense<0.000000e+00> : vector<16x256xf32>
    %55 = tpu.matmul %45, %54, %cst_38 {dimension_numbers = #tpu.dot_dimension_numbers<[1], [0], [0], [1], [0, 0, 1, 1], [], []>} : vector<16x32xbf16>, vector<32x256xbf16>, vector<16x256xf32> -> vector<16x256xf32>
    %56 = vector.broadcast %47 : vector<16x1xf32> to vector<16x256xf32>
    %57 = arith.addf %55, %56 : vector<16x256xf32>
    %58 = vector.extract_strided_slice %57 {offsets = [0, 0], sizes = [8, 256], strides = [1, 1]} : vector<16x256xf32> to vector<8x256xf32>
    %59 = vector.extract_strided_slice %57 {offsets = [8, 0], sizes = [8, 256], strides = [1, 1]} : vector<16x256xf32> to vector<8x256xf32>
    %cst_39 = arith.constant 5.000000e-01 : f32
    %60 = vector.broadcast %cst_39 : f32 to vector<8x256xf32>
    %61 = arith.mulf %58, %60 : vector<8x256xf32>
    %62 = math.tanh %61 : vector<8x256xf32>
    %cst_40 = arith.constant 2.000000e+00 : f32
    %63 = vector.broadcast %cst_40 : f32 to vector<8x256xf32>
    %64 = arith.mulf %63, %62 : vector<8x256xf32>
    %65 = math.exp %64 : vector<8x256xf32>
    %66 = arith.mulf %65, %10 : vector<8x256xf32>
    %67 = arith.addf %66, %59 : vector<8x256xf32>
    %68 = arith.addf %39, %64 : vector<8x256xf32>
    %c0_41 = arith.constant 0 : index
    %c0_42 = arith.constant 0 : index
    %c0_43 = arith.constant 0 : index
    %69 = vector.load %arg4[%c0_41, %c0_42, %c0_43] : memref<1x16x8xbf16, #tpu.memory_space<vmem>>, vector<1x16x8xbf16>
    %70 = vector.shape_cast %69 : vector<1x16x8xbf16> to vector<16x8xbf16>
    %71 = arith.truncf %38 : vector<8x256xf32> to vector<8x256xbf16>
    %cst_44 = arith.constant dense<0.000000e+00> : vector<16x256xf32>
    %72 = tpu.matmul %70, %71, %cst_44 {dimension_numbers = #tpu.dot_dimension_numbers<[1], [0], [0], [1], [0, 0, 1, 1], [], []>} : vector<16x8xbf16>, vector<8x256xbf16>, vector<16x256xf32> -> vector<16x256xf32>
    %c0_45 = arith.constant 0 : index
    %c0_46 = arith.constant 0 : index
    %c0_47 = arith.constant 0 : index
    %73 = vector.load %arg5[%c0_45, %c0_46, %c0_47] : memref<1x16x8xbf16, #tpu.memory_space<vmem>>, vector<1x16x8xbf16>
    %74 = vector.shape_cast %73 : vector<1x16x8xbf16> to vector<16x8xbf16>
    %75 = arith.truncf %67 : vector<8x256xf32> to vector<8x256xbf16>
    %cst_48 = arith.constant dense<0.000000e+00> : vector<16x256xf32>
    %76 = tpu.matmul %74, %75, %cst_48 {dimension_numbers = #tpu.dot_dimension_numbers<[1], [0], [0], [1], [0, 0, 1, 1], [], []>} : vector<16x8xbf16>, vector<8x256xbf16>, vector<16x256xf32> -> vector<16x256xf32>
    %77 = arith.addf %72, %76 : vector<16x256xf32>
    %c0_49 = arith.constant 0 : index
    %c0_50 = arith.constant 0 : index
    %c0_51 = arith.constant 0 : index
    %78 = vector.load %arg6[%c0_49, %c0_50, %c0_51] : memref<1x16x1xf32, #tpu.memory_space<vmem>>, vector<1x16x1xf32>
    %79 = vector.shape_cast %78 : vector<1x16x1xf32> to vector<16x1xf32>
    %80 = vector.broadcast %79 : vector<16x1xf32> to vector<16x256xf32>
    %81 = arith.addf %77, %80 : vector<16x256xf32>
    %82 = vector.extract_strided_slice %81 {offsets = [0, 0], sizes = [8, 256], strides = [1, 1]} : vector<16x256xf32> to vector<8x256xf32>
    %83 = vector.extract_strided_slice %81 {offsets = [8, 0], sizes = [8, 256], strides = [1, 1]} : vector<16x256xf32> to vector<8x256xf32>
    %c1 = arith.constant 1 : index
    %c0_52 = arith.constant 0 : index
    %c0_53 = arith.constant 0 : index
    %84 = vector.load %arg7[%c1, %c0_52, %c0_53] : memref<2x32x8xbf16, #tpu.memory_space<vmem>>, vector<1x32x8xbf16>
    %85 = vector.shape_cast %84 : vector<1x32x8xbf16> to vector<32x8xbf16>
    %c1_54 = arith.constant 1 : index
    %c0_55 = arith.constant 0 : index
    %c0_56 = arith.constant 0 : index
    %86 = vector.load %arg8[%c1_54, %c0_55, %c0_56] : memref<2x32x1xf32, #tpu.memory_space<vmem>>, vector<1x32x1xf32>
    %87 = vector.shape_cast %86 : vector<1x32x1xf32> to vector<32x1xf32>
    %c1_57 = arith.constant 1 : index
    %c0_58 = arith.constant 0 : index
    %c0_59 = arith.constant 0 : index
    %88 = vector.load %arg9[%c1_57, %c0_58, %c0_59] : memref<2x16x32xbf16, #tpu.memory_space<vmem>>, vector<1x16x32xbf16>
    %89 = vector.shape_cast %88 : vector<1x16x32xbf16> to vector<16x32xbf16>
    %c1_60 = arith.constant 1 : index
    %c0_61 = arith.constant 0 : index
    %c0_62 = arith.constant 0 : index
    %90 = vector.load %arg10[%c1_60, %c0_61, %c0_62] : memref<2x16x1xf32, #tpu.memory_space<vmem>>, vector<1x16x1xf32>
    %91 = vector.shape_cast %90 : vector<1x16x1xf32> to vector<16x1xf32>
    %92 = arith.truncf %83 : vector<8x256xf32> to vector<8x256xbf16>
    %cst_63 = arith.constant dense<0.000000e+00> : vector<32x256xf32>
    %93 = tpu.matmul %85, %92, %cst_63 {dimension_numbers = #tpu.dot_dimension_numbers<[1], [0], [0], [1], [0, 0, 1, 1], [], []>} : vector<32x8xbf16>, vector<8x256xbf16>, vector<32x256xf32> -> vector<32x256xf32>
    %94 = vector.broadcast %87 : vector<32x1xf32> to vector<32x256xf32>
    %95 = arith.addf %93, %94 : vector<32x256xf32>
    %cst_64 = arith.constant 0.000000e+00 : f32
    %96 = vector.broadcast %cst_64 : f32 to vector<32x256xf32>
    %97 = arith.maximumf %95, %96 : vector<32x256xf32>
    %98 = arith.truncf %97 : vector<32x256xf32> to vector<32x256xbf16>
    %cst_65 = arith.constant dense<0.000000e+00> : vector<16x256xf32>
    %99 = tpu.matmul %89, %98, %cst_65 {dimension_numbers = #tpu.dot_dimension_numbers<[1], [0], [0], [1], [0, 0, 1, 1], [], []>} : vector<16x32xbf16>, vector<32x256xbf16>, vector<16x256xf32> -> vector<16x256xf32>
    %100 = vector.broadcast %91 : vector<16x1xf32> to vector<16x256xf32>
    %101 = arith.addf %99, %100 : vector<16x256xf32>
    %102 = vector.extract_strided_slice %101 {offsets = [0, 0], sizes = [8, 256], strides = [1, 1]} : vector<16x256xf32> to vector<8x256xf32>
    %103 = vector.extract_strided_slice %101 {offsets = [8, 0], sizes = [8, 256], strides = [1, 1]} : vector<16x256xf32> to vector<8x256xf32>
    %cst_66 = arith.constant 5.000000e-01 : f32
    %104 = vector.broadcast %cst_66 : f32 to vector<8x256xf32>
    %105 = arith.mulf %102, %104 : vector<8x256xf32>
    %106 = math.tanh %105 : vector<8x256xf32>
    %cst_67 = arith.constant 2.000000e+00 : f32
    %107 = vector.broadcast %cst_67 : f32 to vector<8x256xf32>
    %108 = arith.mulf %107, %106 : vector<8x256xf32>
    %109 = math.exp %108 : vector<8x256xf32>
    %110 = arith.mulf %109, %82 : vector<8x256xf32>
    %111 = arith.addf %110, %103 : vector<8x256xf32>
    %112 = arith.addf %68, %108 : vector<8x256xf32>
    %c1_68 = arith.constant 1 : index
    %c0_69 = arith.constant 0 : index
    %c0_70 = arith.constant 0 : index
    %113 = vector.load %arg11[%c1_68, %c0_69, %c0_70] : memref<2x32x8xbf16, #tpu.memory_space<vmem>>, vector<1x32x8xbf16>
    %114 = vector.shape_cast %113 : vector<1x32x8xbf16> to vector<32x8xbf16>
    %c1_71 = arith.constant 1 : index
    %c0_72 = arith.constant 0 : index
    %c0_73 = arith.constant 0 : index
    %115 = vector.load %arg12[%c1_71, %c0_72, %c0_73] : memref<2x32x1xf32, #tpu.memory_space<vmem>>, vector<1x32x1xf32>
    %116 = vector.shape_cast %115 : vector<1x32x1xf32> to vector<32x1xf32>
    %c1_74 = arith.constant 1 : index
    %c0_75 = arith.constant 0 : index
    %c0_76 = arith.constant 0 : index
    %117 = vector.load %arg13[%c1_74, %c0_75, %c0_76] : memref<2x16x32xbf16, #tpu.memory_space<vmem>>, vector<1x16x32xbf16>
    %118 = vector.shape_cast %117 : vector<1x16x32xbf16> to vector<16x32xbf16>
    %c1_77 = arith.constant 1 : index
    %c0_78 = arith.constant 0 : index
    %c0_79 = arith.constant 0 : index
    %119 = vector.load %arg14[%c1_77, %c0_78, %c0_79] : memref<2x16x1xf32, #tpu.memory_space<vmem>>, vector<1x16x1xf32>
    %120 = vector.shape_cast %119 : vector<1x16x1xf32> to vector<16x1xf32>
    %121 = arith.truncf %111 : vector<8x256xf32> to vector<8x256xbf16>
    %cst_80 = arith.constant dense<0.000000e+00> : vector<32x256xf32>
    %122 = tpu.matmul %114, %121, %cst_80 {dimension_numbers = #tpu.dot_dimension_numbers<[1], [0], [0], [1], [0, 0, 1, 1], [], []>} : vector<32x8xbf16>, vector<8x256xbf16>, vector<32x256xf32> -> vector<32x256xf32>
    %123 = vector.broadcast %116 : vector<32x1xf32> to vector<32x256xf32>
    %124 = arith.addf %122, %123 : vector<32x256xf32>
    %cst_81 = arith.constant 0.000000e+00 : f32
    %125 = vector.broadcast %cst_81 : f32 to vector<32x256xf32>
    %126 = arith.maximumf %124, %125 : vector<32x256xf32>
    %127 = arith.truncf %126 : vector<32x256xf32> to vector<32x256xbf16>
    %cst_82 = arith.constant dense<0.000000e+00> : vector<16x256xf32>
    %128 = tpu.matmul %118, %127, %cst_82 {dimension_numbers = #tpu.dot_dimension_numbers<[1], [0], [0], [1], [0, 0, 1, 1], [], []>} : vector<16x32xbf16>, vector<32x256xbf16>, vector<16x256xf32> -> vector<16x256xf32>
    %129 = vector.broadcast %120 : vector<16x1xf32> to vector<16x256xf32>
    %130 = arith.addf %128, %129 : vector<16x256xf32>
    %131 = vector.extract_strided_slice %130 {offsets = [0, 0], sizes = [8, 256], strides = [1, 1]} : vector<16x256xf32> to vector<8x256xf32>
    %132 = vector.extract_strided_slice %130 {offsets = [8, 0], sizes = [8, 256], strides = [1, 1]} : vector<16x256xf32> to vector<8x256xf32>
    %cst_83 = arith.constant 5.000000e-01 : f32
    %133 = vector.broadcast %cst_83 : f32 to vector<8x256xf32>
    %134 = arith.mulf %131, %133 : vector<8x256xf32>
    %135 = math.tanh %134 : vector<8x256xf32>
    %cst_84 = arith.constant 2.000000e+00 : f32
    %136 = vector.broadcast %cst_84 : f32 to vector<8x256xf32>
    %137 = arith.mulf %136, %135 : vector<8x256xf32>
    %138 = math.exp %137 : vector<8x256xf32>
    %139 = arith.mulf %138, %83 : vector<8x256xf32>
    %140 = arith.addf %139, %132 : vector<8x256xf32>
    %141 = arith.addf %112, %137 : vector<8x256xf32>
    %c0_85 = arith.constant 0 : index
    %c0_86 = arith.constant 0 : index
    %c0_87 = arith.constant 0 : index
    %142 = vector.load %arg15[%c0_85, %c0_86, %c0_87] : memref<1x16x256xf32, #tpu.memory_space<vmem>>, vector<1x8x256xf32>
    %143 = vector.shape_cast %142 : vector<1x8x256xf32> to vector<8x256xf32>
    %144 = vector.shape_cast %111 : vector<8x256xf32> to vector<1x8x256xf32>
    tpu.vector_store %arg15[%c0_85, %c0_86, %c0_87], %144 {strides = array<i32>} : memref<1x16x256xf32, #tpu.memory_space<vmem>>, vector<1x8x256xf32>,
    %c0_88 = arith.constant 0 : index
    %c8 = arith.constant 8 : index
    %c0_89 = arith.constant 0 : index
    %145 = vector.load %arg15[%c0_88, %c8, %c0_89] : memref<1x16x256xf32, #tpu.memory_space<vmem>>, vector<1x8x256xf32>
    %146 = vector.shape_cast %145 : vector<1x8x256xf32> to vector<8x256xf32>
    %147 = vector.shape_cast %140 : vector<8x256xf32> to vector<1x8x256xf32>
    tpu.vector_store %arg15[%c0_88, %c8, %c0_89], %147 {strides = array<i32>} : memref<1x16x256xf32, #tpu.memory_space<vmem>>, vector<1x8x256xf32>,
    %cst_90 = arith.constant dense<0.000000e+00> : vector<256xf32>
    %148 = vector.multi_reduction <add>, %141, %cst_90 [0] : vector<8x256xf32> to vector<256xf32>
    %149 = vector.shape_cast %148 : vector<256xf32> to vector<1x256xf32>
    %c0_91 = arith.constant 0 : index
    %c0_92 = arith.constant 0 : index
    %c0_93 = arith.constant 0 : index
    %150 = vector.load %arg16[%c0_91, %c0_92, %c0_93] : memref<1x1x256xf32, #tpu.memory_space<vmem>>, vector<1x1x256xf32>
    %151 = vector.shape_cast %150 : vector<1x1x256xf32> to vector<1x256xf32>
    %152 = vector.shape_cast %149 : vector<1x256xf32> to vector<1x1x256xf32>
    tpu.vector_store %arg16[%c0_91, %c0_92, %c0_93], %152 {strides = array<i32>} : memref<1x1x256xf32, #tpu.memory_space<vmem>>, vector<1x1x256xf32>,
    return
  }
  func.func @transform_0(%arg0: i32) -> (i32, i32, i32) {
    %c0_i32 = arith.constant 0 : i32
    %c0_i32_0 = arith.constant 0 : i32
    %c0_i32_1 = arith.constant 0 : i32
    return %arg0, %c0_i32, %c0_i32_0 : i32, i32, i32
  }
  func.func @transform_1(%arg0: i32) -> (i32, i32) {
    %c0_i32 = arith.constant 0 : i32
    %c0_i32_0 = arith.constant 0 : i32
    %c0_i32_1 = arith.constant 0 : i32
    return %c0_i32, %c0_i32_0 : i32, i32
  }
  func.func @transform_2(%arg0: i32) -> (i32, i32) {
    %c0_i32 = arith.constant 0 : i32
    %c0_i32_0 = arith.constant 0 : i32
    %c0_i32_1 = arith.constant 0 : i32
    return %c0_i32, %c0_i32_0 : i32, i32
  }
  func.func @transform_3(%arg0: i32) -> (i32, i32, i32) {
    %c0_i32 = arith.constant 0 : i32
    %c0_i32_0 = arith.constant 0 : i32
    %c0_i32_1 = arith.constant 0 : i32
    %c0_i32_2 = arith.constant 0 : i32
    return %c0_i32, %c0_i32_0, %c0_i32_1 : i32, i32, i32
  }
  func.func @transform_4(%arg0: i32) -> (i32, i32, i32) {
    %c0_i32 = arith.constant 0 : i32
    %c0_i32_0 = arith.constant 0 : i32
    %c0_i32_1 = arith.constant 0 : i32
    %c0_i32_2 = arith.constant 0 : i32
    return %c0_i32, %c0_i32_0, %c0_i32_1 : i32, i32, i32
  }
  func.func @transform_5(%arg0: i32) -> (i32, i32, i32) {
    %c0_i32 = arith.constant 0 : i32
    %c0_i32_0 = arith.constant 0 : i32
    %c0_i32_1 = arith.constant 0 : i32
    %c0_i32_2 = arith.constant 0 : i32
    return %c0_i32, %c0_i32_0, %c0_i32_1 : i32, i32, i32
  }
  func.func @transform_6(%arg0: i32) -> (i32, i32, i32) {
    %c0_i32 = arith.constant 0 : i32
    %c0_i32_0 = arith.constant 0 : i32
    %c0_i32_1 = arith.constant 0 : i32
    %c0_i32_2 = arith.constant 0 : i32
    return %c0_i32, %c0_i32_0, %c0_i32_1 : i32, i32, i32
  }
  func.func @transform_7(%arg0: i32) -> (i32, i32, i32) {
    %c0_i32 = arith.constant 0 : i32
    %c0_i32_0 = arith.constant 0 : i32
    %c0_i32_1 = arith.constant 0 : i32
    %c0_i32_2 = arith.constant 0 : i32
    return %c0_i32, %c0_i32_0, %c0_i32_1 : i32, i32, i32
  }
  func.func @transform_8(%arg0: i32) -> (i32, i32, i32) {
    %c0_i32 = arith.constant 0 : i32
    %c0_i32_0 = arith.constant 0 : i32
    %c0_i32_1 = arith.constant 0 : i32
    %c0_i32_2 = arith.constant 0 : i32
    return %c0_i32, %c0_i32_0, %c0_i32_1 : i32, i32, i32
  }
  func.func @transform_9(%arg0: i32) -> (i32, i32, i32) {
    %c0_i32 = arith.constant 0 : i32
    %c0_i32_0 = arith.constant 0 : i32
    %c0_i32_1 = arith.constant 0 : i32
    %c0_i32_2 = arith.constant 0 : i32
    return %c0_i32, %c0_i32_0, %c0_i32_1 : i32, i32, i32
  }
  func.func @transform_10(%arg0: i32) -> (i32, i32, i32) {
    %c0_i32 = arith.constant 0 : i32
    %c0_i32_0 = arith.constant 0 : i32
    %c0_i32_1 = arith.constant 0 : i32
    %c0_i32_2 = arith.constant 0 : i32
    return %c0_i32, %c0_i32_0, %c0_i32_1 : i32, i32, i32
  }
  func.func @transform_11(%arg0: i32) -> (i32, i32, i32) {
    %c0_i32 = arith.constant 0 : i32
    %c0_i32_0 = arith.constant 0 : i32
    %c0_i32_1 = arith.constant 0 : i32
    %c0_i32_2 = arith.constant 0 : i32
    return %c0_i32, %c0_i32_0, %c0_i32_1 : i32, i32, i32
  }
  func.func @transform_12(%arg0: i32) -> (i32, i32, i32) {
    %c0_i32 = arith.constant 0 : i32
    %c0_i32_0 = arith.constant 0 : i32
    %c0_i32_1 = arith.constant 0 : i32
    %c0_i32_2 = arith.constant 0 : i32
    return %c0_i32, %c0_i32_0, %c0_i32_1 : i32, i32, i32
  }
  func.func @transform_13(%arg0: i32) -> (i32, i32, i32) {
    %c0_i32 = arith.constant 0 : i32
    %c0_i32_0 = arith.constant 0 : i32
    %c0_i32_1 = arith.constant 0 : i32
    %c0_i32_2 = arith.constant 0 : i32
    return %c0_i32, %c0_i32_0, %c0_i32_1 : i32, i32, i32
  }
  func.func @transform_14(%arg0: i32) -> (i32, i32, i32) {
    %c0_i32 = arith.constant 0 : i32
    %c0_i32_0 = arith.constant 0 : i32
    %c0_i32_1 = arith.constant 0 : i32
    return %arg0, %c0_i32, %c0_i32_0 : i32, i32, i32
  }
  func.func @transform_15(%arg0: i32) -> (i32, i32, i32) {
    %c0_i32 = arith.constant 0 : i32
    %c0_i32_0 = arith.constant 0 : i32
    %c0_i32_1 = arith.constant 0 : i32
    return %arg0, %c0_i32, %c0_i32_0 : i32, i32, i32
  }
}

</mosaic_0001>

<llo_original>
// kernel: custom-call.2
$region0: #{custom-call.2}
  %s0 = inlined_call_operand.vmem [shape: f32[4,16,16], index: 0, kind: input, shape index: {}]
  %s1 = inlined_call_operand.vmem [shape: f32[4,16,16], index: 1, kind: output, shape index: {0}]
  %s2 = inlined_call_operand.hbm [shape: s32[4,16], index: 2, kind: output, shape index: {1}]
  %s3 = inlined_call_operand.hbm [shape: s32[4,16], index: 3, kind: output, shape index: {2}]
  %4 = xla_tuple %s1, %s2, %s3
  $region1: #{custom-call.2} parent=0
    #allocation0 [shape = 'u8[16384]{0}', space=vmem, size = 0x4000, scoped, tag = 'operand span for operand 0']
    #allocation1 [shape = 'u8[16384]{0}', space=vmem, size = 0x4000, scoped, tag = 'operand span for operand 1']
    #allocation2 [shape = 'u8[4096]{0}', space=vmem, size = 0x1000, scoped, tag = 'operand span for operand 2']
    #allocation3 [shape = 'u8[4096]{0}', space=vmem, size = 0x1000, scoped, tag = 'packed  for operand 2']
    #allocation4 [shape = 's32[2]{0}', space=sflag, size = 0x8, scoped, tag = 'scoped memory for custom-call.2']
    #allocation5 [shape = 'u8[4096]{0}', space=vmem, size = 0x1000, scoped, tag = 'operand span for operand 3']
    #allocation6 [shape = 'u8[4096]{0}', space=vmem, size = 0x1000, scoped, tag = 'packed  for operand 3']
    #allocation7 [shape = 's32[2]{0}', space=sflag, size = 0x8, scoped, tag = 'scoped memory for custom-call.2']
    %5 = vsyncpa [#allocation4], 0
    %s6 = scalar_lea.sflag [#allocation4], 1
    %7 = vsyncpa %s6, 0
    %8 = vsyncpa [#allocation7], 0
    %s9 = scalar_lea.sflag [#allocation7], 1
    %10 = vsyncpa %s9, 0
    loop: start=0, step=1, limit=6
    $region2: #{custom-call.2} parent=1 // loop_pre_header
      _
    $region3: #{custom-call.2} parent=1 // loop_header
      %s12 = sphi 0, %s16
      %p13 = scmp.ge.s32.totalorder %s12, 6
      %s24 = sphi 0, %s26
      %s27 = sphi 0, %s24
      %s28 = sphi 0, %s27
      %s44 = sphi 0, %s28
      %s52 = sphi 0, %s54
      %s55 = sphi 0, %s52
      %s56 = sphi 0, %s55
      %s72 = sphi 0, %s56
    $region4: #{custom-call.2} parent=1 // loop_header_branch
      %15 = sbr.rel (%p13) target = $region8
    $region5: #{custom-call.2} parent=1 // loop_body
      %s17 = ssub.s32 %s12, 1
      %s18 = ssub.s32 %s12, 2
      %s19 = sadd.s32 %s12, 1
      %s20 = sshrl.u32 %s12, 3
      %s21 = sshrl.u32 %s19, 3
      %s22 = ssub.s32 %s20, %s21
      %p23 = scmp.eq.s32.totalorder %s22, 0
      %s25 = sadd.s32 %s24, 1
      %s26 = scalar_select %p23, %s24, %s25
      %p29 = pneg %p23
      %p30 = scmp.eq.s32.totalorder %s12, 3
      %p31 = por %p29, %p30
      %p32 = scmp.ne.s32.totalorder %s24, %s27
      %p33 = scmp.eq.s32.totalorder %s12, 0
      %p34 = por %p32, %p33
      %p35 = scmp.ne.s32.totalorder %s24, %s27
      %p36 = scmp.eq.s32.totalorder %s17, 3
      %p37 = por %p35, %p36
      %p38 = scmp.ne.s32.totalorder %s27, %s28
      %p39 = scmp.eq.s32.totalorder %s17, 0
      %p40 = por %p38, %p39
      %p41 = scmp.ne.s32.totalorder %s27, %s28
      %p42 = scmp.eq.s32.totalorder %s18, 3
      %p43 = por %p41, %p42
      %p45 = scmp.ne.s32.totalorder %s28, %s44
      %p46 = scmp.eq.s32.totalorder %s18, 0
      %p47 = por %p45, %p46
      %s48 = sshrl.u32 %s12, 3
      %s49 = sshrl.u32 %s19, 3
      %s50 = ssub.s32 %s48, %s49
      %p51 = scmp.eq.s32.totalorder %s50, 0
      %s53 = sadd.s32 %s52, 1
      %s54 = scalar_select %p51, %s52, %s53
      %p57 = pneg %p51
      %p58 = scmp.eq.s32.totalorder %s12, 3
      %p59 = por %p57, %p58
      %p60 = scmp.ne.s32.totalorder %s52, %s55
      %p61 = scmp.eq.s32.totalorder %s12, 0
      %p62 = por %p60, %p61
      %p63 = scmp.ne.s32.totalorder %s52, %s55
      %p64 = scmp.eq.s32.totalorder %s17, 3
      %p65 = por %p63, %p64
      %p66 = scmp.ne.s32.totalorder %s55, %s56
      %p67 = scmp.eq.s32.totalorder %s17, 0
      %p68 = por %p66, %p67
      %p69 = scmp.ne.s32.totalorder %s55, %s56
      %p70 = scmp.eq.s32.totalorder %s18, 3
      %p71 = por %p69, %p70
      %p73 = scmp.ne.s32.totalorder %s56, %s72
      %p74 = scmp.eq.s32.totalorder %s18, 0
      %p75 = por %p73, %p74
      %p76 = scmp.le.s32.totalorder 1, %s12
      %p77 = scmp.lt.s32.totalorder %s12, 5
      %p78 = pnand %p76, %p77
      %p79 = pneg %p78
      // Predicated region
      $region9: #{custom-call.2} parent=5 // pred_check
        _
      $region10: #{custom-call.2} parent=5 // pred_check_branch
        %81 = sbr.rel (%p78) target = $region12
      $region11: #{custom-call.2} parent=5 // pred_region
        %s82 = ssub.s32 %s12, 1
      $region12: #{custom-call.2} parent=5 // pred_fallthru
        _
      %p83 = scmp.lt.s32.totalorder %s12, 4
      // Predicated region
      $region13: #{custom-call.2} parent=5 // pred_check
        %p84 = pneg %p83
      $region14: #{custom-call.2} parent=5 // pred_check_branch
        %86 = sbr.rel (%p84) target = $region16
      $region15: #{custom-call.2} parent=5 // pred_region
        %s87 = sand.u32 %s12, 1
        %s88 = sand.u32 %s12, 1
        %s89 = smul.addr %s88, 16
        %s90 = scalar_lea.vmem [#allocation0], %s89
        %s91 = smul.addr %s12, 16
        %s92 = scalar_lea.vmem %s0, %s91
        // Predicated region
        $region17: #{custom-call.2} parent=15 // pred_check
          _
        $region18: #{custom-call.2} parent=15 // pred_check_branch
          %94 = sbr.rel (0) target = $region20
        $region19: #{custom-call.2} parent=15 // pred_region
          // Predicated region
          $region21: #{custom-call.2} parent=19 // pred_check
            _
          $region22: #{custom-call.2} parent=19 // pred_check_branch
            %96 = sbr.rel (0) target = $region24
          $region23: #{custom-call.2} parent=19 // pred_region
            loop: start=0, step=1, limit=1
            $region25: #{custom-call.2} parent=23 // loop_pre_header
              _
            $region26: #{custom-call.2} parent=23 // loop_header
              %s98 = sphi 0, %s102
              %p99 = scmp.ge.s32.totalorder %s98, 1
              %s103 = sphi %s92, %s92
              %s104 = sphi %s90, %s90
            $region27: #{custom-call.2} parent=23 // loop_header_branch
              %101 = sbr.rel (%p99) target = $region31
            $region28: #{custom-call.2} parent=23 // loop_body
              %v105 = vld [vmem:[%s103] sm:$0xff]
              %106 = vst [vmem:[%s104] sm:$0xff] %v105
              %v107 = vld [vmem:[%s103 + $0x8] sm:$0xff]
              %108 = vst [vmem:[%s104 + $0x8] sm:$0xff] %v107
            $region29: #{custom-call.2} parent=23 // loop_footer
              %s102 = sadd.s32 1, %s98
            $region30: #{custom-call.2} parent=23 // loop_footer_branch
              %97 = sbr.rel target = $region26
            $region31: #{custom-call.2} parent=23 // loop_exit
              _
          $region24: #{custom-call.2} parent=19 // pred_fallthru
            _
          // Predicated region
          $region32: #{custom-call.2} parent=19 // pred_check
            _
          $region33: #{custom-call.2} parent=19 // pred_check_branch
            %110 = sbr.rel target = $region35
          $region34: #{custom-call.2} parent=19 // pred_region
            _
          $region35: #{custom-call.2} parent=19 // pred_fallthru
            _
        $region20: #{custom-call.2} parent=15 // pred_fallthru
          _
        %111 = vnop
      $region16: #{custom-call.2} parent=5 // pred_fallthru
        _
      %p112 = scmp.le.s32.totalorder 1, %s12
      %p113 = scmp.lt.s32.totalorder %s12, 5
      %p114 = pnand %p112, %p113
      %p115 = pneg %p114
      // Predicated region
      $region36: #{custom-call.2} parent=5 // pred_check
        _
      $region37: #{custom-call.2} parent=5 // pred_check_branch
        %117 = sbr.rel (%p114) target = $region39
      $region38: #{custom-call.2} parent=5 // pred_region
        #allocation8 [shape = 's32[16,128]{1,0}', space=vmem, size = 0x2000, scoped, tag = 'scratch for permutations']
        %s118 = ssub.s32 %s12, 1
        %s119 = sand.u32 %s17, 1
        %s120 = sand.u32 %s17, 1
        %s121 = smul.addr %s120, 16
        %s122 = scalar_lea.vmem [#allocation0], %s121
        %s123 = sand.u32 %s17, 1
        %s124 = sand.u32 %s17, 1
        %s125 = smul.addr %s124, 16
        %s126 = scalar_lea.vmem [#allocation0], %s125
        %s127 = sand.u32 %s17, 1
        %s128 = sand.u32 %s17, 1
        %s129 = smul.addr %s128, 16
        %s130 = scalar_lea.vmem [#allocation1], %s129
        %p131 = pneg %p40
        %p132 = pneg %p37
        %s133 = sand.u32 %s27, 1
        %s134 = scalar_lea.sflag [#allocation4], %s133
        %s135 = sand.u32 %s27, 1
        %s136 = smul.addr %s135, 4
        %s137 = scalar_lea.vmem [#allocation3], %s136
        %p138 = pneg %p68
        %p139 = pneg %p65
        %s140 = sand.u32 %s55, 1
        %s141 = scalar_lea.sflag [#allocation7], %s140
        %s142 = sand.u32 %s55, 1
        %s143 = smul.addr %s142, 4
        %s144 = scalar_lea.vmem [#allocation6], %s143
        %s145 = sshrl.u32 %s17, 3
        %s146 = sshrl.u32 %s17, 3
        %v147 = vld [vmem:[%s122] sm:$0xff]
        %148 = vst [vmem:[%s130] sm:$0xff] %v147
        %s149 = scalar_lea.vmem %s130, 8 [#allocation1]
        %s150 = scalar_lea.vmem %s122, 8 [#allocation0]
        %v151 = vld [vmem:[%s150] sm:$0xff]
        %152 = vst [vmem:[%s149] sm:$0xff] %v151
        %s153 = sand.u32 %s17, 7
        %s154 = scalar_lea.vmem [#allocation2], %s153
        %s155 = sand.u32 %s17, 7
        %s156 = scalar_lea.vmem [#allocation5], %s155
        %157 = vst [vmem:[%s154] sm:$0x1] 0
        %v158 = vlaneseq
        %v159 = vshrl.u32 %v158, 7
        %v160 = vmov %v159
        loop: start=0, step=1, limit=2
        $region40: #{custom-call.2} parent=38 // loop_pre_header
          _
        $region41: #{custom-call.2} parent=38 // loop_header
          %s162 = sphi 0, %s166
          %p163 = scmp.ge.s32.totalorder %s162, 2
        $region42: #{custom-call.2} parent=38 // loop_header_branch
          %165 = sbr.rel (%p163) target = $region46
        $region43: #{custom-call.2} parent=38 // loop_body
          %s167 = smul.addr %s162, 8
          %s168 = scalar_lea.vmem [#allocation8], %s167
          %s169 = smul.u32 %s162, 8
          %v170 = vstv %s169
          %v171 = vadd.s32 %v160, %v170
          %172 = vst [vmem:[%s168] sm:$0xff] %v171
        $region44: #{custom-call.2} parent=38 // loop_footer
          %s166 = sadd.s32 1, %s162
        $region45: #{custom-call.2} parent=38 // loop_footer_branch
          %161 = sbr.rel target = $region41
        $region46: #{custom-call.2} parent=38 // loop_exit
          _
        loop: start=0, step=1, limit=16
        $region47: #{custom-call.2} parent=38 // loop_pre_header
          _
        $region48: #{custom-call.2} parent=38 // loop_header
          %s174 = sphi 0, %s178
          %p175 = scmp.ge.s32.totalorder %s174, 16
        $region49: #{custom-call.2} parent=38 // loop_header_branch
          %177 = sbr.rel (%p175) target = $region53
        $region50: #{custom-call.2} parent=38 // loop_body
          %v179 = vstv %s174
          %v180 = vlaneseq
          %v181 = vshrl.u32 %v180, 7
          %v182 = vmov %v181
          %v183 = vld [vmem:[%s130] sm:$0xff]
          %v184 = vand.u32 2147483647, %v183
          %v186 = vstv %s174
          %vm187 = vcmp.ge.s32.totalorder %v182, %v186
          %vm188 = vcmp.lt.s32.totalorder %v182, 16
          %vm189 = vmand %vm187, %vm188
          %vm190 = vcmp.lt.f32.partialorder -inf, %v184
          %vm191 = vmand %vm189, %vm190
          %v192 = vsel %vm191, %v182, %v179
          %v193 = vsel %vm191, %v184, -inf
          %s194 = scalar_lea.vmem %s130, 8 [#allocation1]
          %v195 = vld [vmem:[%s194] sm:$0xff]
          %v196 = vand.u32 2147483647, %v195
          %v197 = vadd.s32 %v182, 8
          %v198 = vstv %s174
          %vm199 = vcmp.ge.s32.totalorder %v197, %v198
          %vm200 = vcmp.lt.s32.totalorder %v197, 16
          %vm201 = vmand %vm199, %vm200
          %vm202 = vcmp.lt.f32.partialorder %v193, %v196
          %vm203 = vmand %vm201, %vm202
          %v204 = vsel %vm203, %v197, %v192
          %v205 = vsel %vm203, %v196, %v193
          %v206 = vrot.slane %v205, 1
          %v207 = vrot.slane %v204, 1
          %vm208 = vcmp.ge.f32.partialorder %v206, %v205
          %v209 = vsel %vm208, %v206, %v205
          %v210 = vsel %vm208, %v207, %v204
          %v211 = vrot.slane %v206, 1
          %v212 = vrot.slane %v207, 1
          %vm213 = vcmp.ge.f32.partialorder %v211, %v209
          %v214 = vsel %vm213, %v211, %v209
          %v215 = vsel %vm213, %v212, %v210
          %v216 = vrot.slane %v211, 1
          %v217 = vrot.slane %v212, 1
          %vm218 = vcmp.ge.f32.partialorder %v216, %v214
          %v219 = vsel %vm218, %v216, %v214
          %v220 = vsel %vm218, %v217, %v215
          %v221 = vrot.slane %v216, 1
          %v222 = vrot.slane %v217, 1
          %vm223 = vcmp.ge.f32.partialorder %v221, %v219
          %v224 = vsel %vm223, %v221, %v219
          %v225 = vsel %vm223, %v222, %v220
          %v226 = vrot.slane %v221, 1
          %v227 = vrot.slane %v222, 1
          %vm228 = vcmp.ge.f32.partialorder %v226, %v224
          %v229 = vsel %vm228, %v226, %v224
          %v230 = vsel %vm228, %v227, %v225
          %v231 = vrot.slane %v226, 1
          %v232 = vrot.slane %v227, 1
          %vm233 = vcmp.ge.f32.partialorder %v231, %v229
          %v234 = vsel %vm233, %v231, %v229
          %v235 = vsel %vm233, %v232, %v230
          %v236 = vrot.slane %v231, 1
          %v237 = vrot.slane %v232, 1
          %vm238 = vcmp.ge.f32.partialorder %v236, %v234
          %v239 = vsel %vm238, %v236, %v234
          %v240 = vsel %vm238, %v237, %v235
          %s241 = ssub.s32 128, %s174
          %242 = vrot.lane.b32.xlu0 %v240, %s241
          %v243 = vpop.permute.xlu0 %242
          %s244 = vtos %v243
          %v245 = vstv %s174
          %v246 = vlaneseq
          %v247 = vand.u32 %v246, 127
          %vm248 = vcmp.eq.s32.totalorder %v247, %v245
          %v249 = vstv %s244
          %v250 = vld [vmem:[%s154] ss:$0 sm:$0xff]
          %v251 = vsel %vm248, %v249, %v250
          %252 = vst [vmem:[%s154] sm:$0x1] %v251
          %s253 = scalar_lea.vmem %s130, %s174 [#allocation1]
          %s254 = scalar_lea.vmem %s130, %s244 [#allocation1]
          %v255 = vld [vmem:[%s253] ss:$0 sm:$0xff]
          %v256 = vld [vmem:[%s254] ss:$0 sm:$0xff]
          %257 = vst [vmem:[%s254] sm:$0x1] %v255
          %258 = vst [vmem:[%s253] sm:$0x1] %v256
          %s259 = scalar_lea.vmem [#allocation8], %s174
          %s260 = scalar_lea.vmem [#allocation8], %s244
          %v261 = vld [vmem:[%s259] ss:$0 sm:$0xff]
          %v262 = vld [vmem:[%s260] ss:$0 sm:$0xff]
          %263 = vst [vmem:[%s260] sm:$0x1] %v261
          %264 = vst [vmem:[%s259] sm:$0x1] %v262
          %vm265 = vcmp.ne.f32.partialorder %v256, 0.0
          %vm266 = vmand %vm248, %vm265
          %v267 = vsel %vm266, %v256, 1.0
          %v268 = vlaneseq
          %v269 = vand.u32 %v268, 127
          %v270 = vstv %s174
          %vm271 = vcmp.gt.s32.totalorder %v269, %v270
          %v272 = vsel %vm271, %v256, 0.0
          %v273 = vlaneseq
          %v274 = vshrl.u32 %v273, 7
          %v275 = vmov %v274
          %v276 = vld [vmem:[%s130] sm:$0xff]
          %v278 = vstv %s174
          %vm279 = vcmp.gt.s32.totalorder %v275, %v278
          %v280 = vsel %vm279, %v267, 1.0
          %v281 = vrcp.pop %v280
          %v282 = vmul.f32 %v280, %v281
          %v283 = vsub.f32 1.0, %v282
          %v284 = vmul.f32 %v281, %v283
          %v285 = vadd.f32 %v281, %v284
          %vm286 = vweird.f32 %v280
          %vm287 = vweird.f32 %v281
          %vm288 = vmor %vm286, %vm287
          %v289 = vsel %vm288, %v281, %v285
          %v290 = vand.u32 2147483647, %v280
          %vm291 = vcmp.eq.f32.partialorder %v290, 8.507059e+37
          %v292 = vand.u32 %v280, 2147483648
          %v293 = vor.u32 1.1754944e-38, %v292
          %v294 = vsel %vm291, %v293, %v289
          %v295 = vmul.f32 %v276, %v294
          %vm296 = vmand %vm279, %vm248
          %v297 = vsel %vm296, %v295, 0.0
          %298 = vadd.xlane.f32.xlu0 %v297
          %v299 = vpop.xlane.xlu0 %298
          %v300 = vmul.f32 %v299, %v272
          %v301 = vsub.f32 %v295, %v300
          %302 = vst [vmem:[%s130] sm:$0xff] %v301
          %s303 = scalar_lea.vmem %s130, 8 [#allocation1]
          %v304 = vld [vmem:[%s303] sm:$0xff]
          %v305 = vadd.s32 %v275, 8
          %v306 = vstv %s174
          %vm307 = vcmp.gt.s32.totalorder %v305, %v306
          %v308 = vsel %vm307, %v267, 1.0
          %v309 = vrcp.pop %v308
          %v310 = vmul.f32 %v308, %v309
          %v311 = vsub.f32 1.0, %v310
          %v312 = vmul.f32 %v309, %v311
          %v313 = vadd.f32 %v309, %v312
          %vm314 = vweird.f32 %v308
          %vm315 = vweird.f32 %v309
          %vm316 = vmor %vm314, %vm315
          %v317 = vsel %vm316, %v309, %v313
          %v318 = vand.u32 2147483647, %v308
          %vm319 = vcmp.eq.f32.partialorder %v318, 8.507059e+37
          %v320 = vand.u32 %v308, 2147483648
          %v321 = vor.u32 1.1754944e-38, %v320
          %v322 = vsel %vm319, %v321, %v317
          %v323 = vmul.f32 %v304, %v322
          %vm324 = vmand %vm307, %vm248
          %v325 = vsel %vm324, %v323, 0.0
          %326 = vadd.xlane.f32.xlu0 %v325
          %v327 = vpop.xlane.xlu0 %326
          %v328 = vmul.f32 %v327, %v272
          %v329 = vsub.f32 %v323, %v328
          %330 = vst [vmem:[%s303] sm:$0xff] %v329
        $region51: #{custom-call.2} parent=38 // loop_footer
          %s178 = sadd.s32 1, %s174
        $region52: #{custom-call.2} parent=38 // loop_footer_branch
          %173 = sbr.rel target = $region48
        $region53: #{custom-call.2} parent=38 // loop_exit
          _
        %v331 = vld [vmem:[#allocation8] sm:$0xff]
        %s332 = scalar_lea.vmem [#allocation8], 8
        %v333 = vld [vmem:[%s332] sm:$0xff]
        %s334 = scalar_lea.vmem [#allocation8], 16
        %s335 = scalar_lea.vmem [#allocation8], 24
        %s336 = scalar_lea.vmem [#allocation8], 32
        %s337 = scalar_lea.vmem [#allocation8], 40
        %s338 = scalar_lea.vmem [#allocation8], 48
        %s339 = scalar_lea.vmem [#allocation8], 56
        %s340 = scalar_lea.vmem [#allocation8], 64
        %s341 = scalar_lea.vmem [#allocation8], 72
        %s342 = scalar_lea.vmem [#allocation8], 80
        %s343 = scalar_lea.vmem [#allocation8], 88
        %s344 = scalar_lea.vmem [#allocation8], 96
        %s345 = scalar_lea.vmem [#allocation8], 104
        %s346 = scalar_lea.vmem [#allocation8], 112
        %s347 = scalar_lea.vmem [#allocation8], 120
        %348 = vxpose.xlu0.b32.start [1/16] %v331, 128
        %349 = vxpose.xlu0.b32.cont [2/16] %v333, 128
        %350 = vxpose.xlu0.b32.cont [3/16] 0, 128
        %351 = vxpose.xlu0.b32.cont [4/16] 0, 128
        %352 = vxpose.xlu0.b32.cont [5/16] 0, 128
        %353 = vxpose.xlu0.b32.cont [6/16] 0, 128
        %354 = vxpose.xlu0.b32.cont [7/16] 0, 128
        %355 = vxpose.xlu0.b32.cont [8/16] 0, 128
        %356 = vxpose.xlu0.b32.cont [9/16] 0, 128
        %357 = vxpose.xlu0.b32.cont [10/16] 0, 128
        %358 = vxpose.xlu0.b32.cont [11/16] 0, 128
        %359 = vxpose.xlu0.b32.cont [12/16] 0, 128
        %360 = vxpose.xlu0.b32.cont [13/16] 0, 128
        %361 = vxpose.xlu0.b32.cont [14/16] 0, 128
        %362 = vxpose.xlu0.b32.cont [15/16] 0, 128
        %363 = vxpose.xlu0.b32.end [16/16] 0, 128
        %v364 = vpop.trf.xlu0
        %v365 = vpop.trf.xlu0
        %v366 = vpop.trf.xlu0
        %v367 = vpop.trf.xlu0
        %v368 = vpop.trf.xlu0
        %v369 = vpop.trf.xlu0
        %v370 = vpop.trf.xlu0
        %v371 = vpop.trf.xlu0
        %v372 = vpop.trf.xlu0
        %v373 = vpop.trf.xlu0
        %v374 = vpop.trf.xlu0
        %v375 = vpop.trf.xlu0
        %v376 = vpop.trf.xlu0
        %v377 = vpop.trf.xlu0
        %v378 = vpop.trf.xlu0
        %v379 = vpop.trf.xlu0
        %380 = vst [vmem:[%s156] sm:$0x1] %v364
        %s382 = ssub.s32 16, 1
        %v383 = vld [vmem:[#allocation2] sm:%s382]
        %s385 = ssub.s32 16, 1
        %386 = vst [vmem:[%s137] sm:%s385] %v383
        %s388 = ssub.s32 16, 1
        %v389 = vld [vmem:[#allocation5] sm:%s388]
        %s391 = ssub.s32 16, 1
        %392 = vst [vmem:[%s144] sm:%s391] %v389
        %s393 = sand.u32 %s17, 1
        %s394 = sand.u32 %s17, 1
        %s395 = smul.addr %s394, 16
        %s396 = scalar_lea.vmem [#allocation1], %s395
        %s397 = sand.u32 %s27, 1
        %s398 = scalar_lea.sflag [#allocation4], %s397
        %s399 = sand.u32 %s27, 1
        %s400 = smul.addr %s399, 4
        %s401 = scalar_lea.vmem [#allocation3], %s400
        %s402 = sand.u32 %s55, 1
        %s403 = scalar_lea.sflag [#allocation7], %s402
        %s404 = sand.u32 %s55, 1
        %s405 = smul.addr %s404, 4
        %s406 = scalar_lea.vmem [#allocation6], %s405
        %s407 = smul.addr %s17, 16
        %s408 = scalar_lea.vmem %s1, %s407
        // Predicated region
        $region54: #{custom-call.2} parent=38 // pred_check
          _
        $region55: #{custom-call.2} parent=38 // pred_check_branch
          %410 = sbr.rel (0) target = $region57
        $region56: #{custom-call.2} parent=38 // pred_region
          // Predicated region
          $region58: #{custom-call.2} parent=56 // pred_check
            _
          $region59: #{custom-call.2} parent=56 // pred_check_branch
            %412 = sbr.rel (0) target = $region61
          $region60: #{custom-call.2} parent=56 // pred_region
            loop: start=0, step=1, limit=1
            $region62: #{custom-call.2} parent=60 // loop_pre_header
              _
            $region63: #{custom-call.2} parent=60 // loop_header
              %s414 = sphi 0, %s418
              %p415 = scmp.ge.s32.totalorder %s414, 1
              %s419 = sphi %s396, %s396
              %s420 = sphi %s408, %s408
            $region64: #{custom-call.2} parent=60 // loop_header_branch
              %417 = sbr.rel (%p415) target = $region68
            $region65: #{custom-call.2} parent=60 // loop_body
              %v421 = vld [vmem:[%s419] sm:$0xff]
              %422 = vst [vmem:[%s420] sm:$0xff] %v421
              %v423 = vld [vmem:[%s419 + $0x8] sm:$0xff]
              %424 = vst [vmem:[%s420 + $0x8] sm:$0xff] %v423
            $region66: #{custom-call.2} parent=60 // loop_footer
              %s418 = sadd.s32 1, %s414
            $region67: #{custom-call.2} parent=60 // loop_footer_branch
              %413 = sbr.rel target = $region63
            $region68: #{custom-call.2} parent=60 // loop_exit
              _
          $region61: #{custom-call.2} parent=56 // pred_fallthru
            _
          // Predicated region
          $region69: #{custom-call.2} parent=56 // pred_check
            _
          $region70: #{custom-call.2} parent=56 // pred_check_branch
            %426 = sbr.rel target = $region72
          $region71: #{custom-call.2} parent=56 // pred_region
            _
          $region72: #{custom-call.2} parent=56 // pred_fallthru
            _
        $region57: #{custom-call.2} parent=38 // pred_fallthru
          _
        %427 = vnop
        // Predicated region
        $region73: #{custom-call.2} parent=38 // pred_check
          %p428 = pneg %p37
        $region74: #{custom-call.2} parent=38 // pred_check_branch
          %430 = sbr.rel (%p428) target = $region76
        $region75: #{custom-call.2} parent=38 // pred_region
          %s431 = sshrl.u32 %s17, 3
          %433 = vsyncadd %s398, 0
          %s434 = smul.addr %s431, 4
          %s435 = scalar_lea.hbm %s2, %s434
          %s437 = sshll.u32 %s401, 4
          %s438 = int_to_ptr.vmem [resolvable:$true] %s437
          %s439 = sshll.u32 %s435, 4
          %s440 = int_to_ptr.hbm [resolvable:$true] %s439
          %442 = dma.vmem_to_hbm [thread:$0]  %s438, 64, %s440, %s398
        $region76: #{custom-call.2} parent=38 // pred_fallthru
          _
        // Predicated region
        $region77: #{custom-call.2} parent=38 // pred_check
          %p443 = pneg %p65
        $region78: #{custom-call.2} parent=38 // pred_check_branch
          %445 = sbr.rel (%p443) target = $region80
        $region79: #{custom-call.2} parent=38 // pred_region
          %s446 = sshrl.u32 %s17, 3
          %448 = vsyncadd %s403, 0
          %s449 = smul.addr %s446, 4
          %s450 = scalar_lea.hbm %s3, %s449
          %s452 = sshll.u32 %s406, 4
          %s453 = int_to_ptr.vmem [resolvable:$true] %s452
          %s454 = sshll.u32 %s450, 4
          %s455 = int_to_ptr.hbm [resolvable:$true] %s454
          %457 = dma.vmem_to_hbm [thread:$0]  %s453, 64, %s455, %s403
        $region80: #{custom-call.2} parent=38 // pred_fallthru
          _
      $region39: #{custom-call.2} parent=5 // pred_fallthru
        _
      %p458 = scmp.le.s32.totalorder 2, %s12
      // Predicated region
      $region81: #{custom-call.2} parent=5 // pred_check
        %p459 = pneg %p458
      $region82: #{custom-call.2} parent=5 // pred_check_branch
        %461 = sbr.rel (%p459) target = $region84
      $region83: #{custom-call.2} parent=5 // pred_region
        %s462 = ssub.s32 %s12, 2
        %s463 = sand.u32 %s18, 1
        %s464 = sand.u32 %s18, 1
        %s465 = smul.addr %s464, 16
        %s466 = scalar_lea.vmem [#allocation1], %s465
        // Predicated region
        $region85: #{custom-call.2} parent=83 // pred_check
          %p467 = pneg %p43
        $region86: #{custom-call.2} parent=83 // pred_check_branch
          %469 = sbr.rel (%p467) target = $region88
        $region87: #{custom-call.2} parent=83 // pred_region
          %s470 = sand.u32 %s28, 1
          %s471 = scalar_lea.sflag [#allocation4], %s470
          %s472 = sand.u32 %s28, 1
          %s473 = smul.addr %s472, 4
          %s474 = scalar_lea.vmem [#allocation3], %s473
          %476 = dma.done %s471, 64
        $region88: #{custom-call.2} parent=83 // pred_fallthru
          _
        // Predicated region
        $region89: #{custom-call.2} parent=83 // pred_check
          %p477 = pneg %p71
        $region90: #{custom-call.2} parent=83 // pred_check_branch
          %479 = sbr.rel (%p477) target = $region92
        $region91: #{custom-call.2} parent=83 // pred_region
          %s480 = sand.u32 %s56, 1
          %s481 = scalar_lea.sflag [#allocation7], %s480
          %s482 = sand.u32 %s56, 1
          %s483 = smul.addr %s482, 4
          %s484 = scalar_lea.vmem [#allocation6], %s483
          %486 = dma.done %s481, 64
        $region92: #{custom-call.2} parent=83 // pred_fallthru
          _
      $region84: #{custom-call.2} parent=5 // pred_fallthru
        _
    $region6: #{custom-call.2} parent=1 // loop_footer
      %s16 = sadd.s32 1, %s12
    $region7: #{custom-call.2} parent=1 // loop_footer_branch
      %11 = sbr.rel target = $region3
    $region8: #{custom-call.2} parent=1 // loop_exit
      _
    %487 = vsyncpa [#allocation4], 1
    %s488 = scalar_lea.sflag [#allocation4], 1
    %489 = vsyncpa %s488, 1
    %490 = vsyncpa [#allocation7], 1
    %s491 = scalar_lea.sflag [#allocation7], 1
    %492 = vsyncpa %s491, 1

// kernel: flow_block_forward.1
$region0: #{flow_block_forward.1}
  #allocation0 [shape = 'u32[]', space=smem, size = 0x4, offset = 0x4, fixed_abs, tag = 'smem constant byte address 0x4 - core index']
  #allocation1 [shape = 'u32[72,128]{1,0:T(1,128)}', space=vmem, size = 0x9000, scoped, tag = 'internal scratch']
  %s0 = inlined_call_operand.vmem [shape: f32[2,16,256], index: 0, kind: input, shape index: {}]
  %s1 = inlined_call_operand.vmem [shape: bf16[16,16], index: 1, kind: input, shape index: {}]
  %s2 = inlined_call_operand.vmem [shape: f32[16,1], index: 2, kind: input, shape index: {}]
  %s3 = inlined_call_operand.vmem [shape: bf16[1,16,8], index: 3, kind: input, shape index: {}]
  %s4 = inlined_call_operand.vmem [shape: bf16[1,16,8], index: 4, kind: input, shape index: {}]
  %s5 = inlined_call_operand.vmem [shape: f32[1,16,1], index: 5, kind: input, shape index: {}]
  %s6 = inlined_call_operand.vmem [shape: bf16[2,32,8], index: 6, kind: input, shape index: {}]
  %s7 = inlined_call_operand.vmem [shape: f32[2,32,1], index: 7, kind: input, shape index: {}]
  %s8 = inlined_call_operand.vmem [shape: bf16[2,16,32], index: 8, kind: input, shape index: {}]
  %s9 = inlined_call_operand.vmem [shape: f32[2,16,1], index: 9, kind: input, shape index: {}]
  %s10 = inlined_call_operand.vmem [shape: bf16[2,32,8], index: 10, kind: input, shape index: {}]
  %s11 = inlined_call_operand.vmem [shape: f32[2,32,1], index: 11, kind: input, shape index: {}]
  %s12 = inlined_call_operand.vmem [shape: bf16[2,16,32], index: 12, kind: input, shape index: {}]
  %s13 = inlined_call_operand.vmem [shape: f32[2,16,1], index: 13, kind: input, shape index: {}]
  %s14 = inlined_call_operand.vmem [shape: f32[2,16,256], index: 14, kind: output, shape index: {0}]
  %s15 = inlined_call_operand.vmem [shape: f32[2,1,256], index: 15, kind: output, shape index: {1}]
  %16 = xla_tuple %s14, %s15
  %s17 = sld [smem:[#allocation0]]
  $region97: #{flow_block_forward.1} parent=0
    _
  %s19 = ssub.s32 1, %s17
  %s20 = scalar_select 0, %s19, %s17
  loop: start=0, step=1, limit=4
  $region2: #{flow_block_forward.1} parent=0 // loop_pre_header
    _
  $region3: #{flow_block_forward.1} parent=0 // loop_header
    %s22 = sphi 0, %s26
    %p23 = scmp.ge.s32.totalorder %s22, 4
    %s32 = sphi 0, %s34
    %s35 = sphi 0, %s32
    %s36 = sphi 0, %s35
    %s52 = sphi 0, %s36
    %s56 = sphi 0, %s56
    %s58 = sphi 0, %s56
    %s59 = sphi 0, %s58
    %s73 = sphi 0, %s59
    %s77 = sphi 0, %s77
    %s79 = sphi 0, %s77
    %s80 = sphi 0, %s79
    %s94 = sphi 0, %s80
    %s98 = sphi 0, %s98
    %s100 = sphi 0, %s98
    %s101 = sphi 0, %s100
    %s115 = sphi 0, %s101
    %s119 = sphi 0, %s119
    %s121 = sphi 0, %s119
    %s122 = sphi 0, %s121
    %s136 = sphi 0, %s122
    %s140 = sphi 0, %s140
    %s142 = sphi 0, %s140
    %s143 = sphi 0, %s142
    %s157 = sphi 0, %s143
    %s161 = sphi 0, %s161
    %s163 = sphi 0, %s161
    %s164 = sphi 0, %s163
    %s178 = sphi 0, %s164
    %s182 = sphi 0, %s182
    %s184 = sphi 0, %s182
    %s185 = sphi 0, %s184
    %s199 = sphi 0, %s185
    %s203 = sphi 0, %s203
    %s205 = sphi 0, %s203
    %s206 = sphi 0, %s205
    %s220 = sphi 0, %s206
    %s224 = sphi 0, %s224
    %s226 = sphi 0, %s224
    %s227 = sphi 0, %s226
    %s241 = sphi 0, %s227
    %s245 = sphi 0, %s245
    %s247 = sphi 0, %s245
    %s248 = sphi 0, %s247
    %s262 = sphi 0, %s248
    %s266 = sphi 0, %s266
    %s268 = sphi 0, %s266
    %s269 = sphi 0, %s268
    %s283 = sphi 0, %s269
    %s287 = sphi 0, %s287
    %s289 = sphi 0, %s287
    %s290 = sphi 0, %s289
    %s304 = sphi 0, %s290
    %s308 = sphi 0, %s308
    %s310 = sphi 0, %s308
    %s311 = sphi 0, %s310
    %s325 = sphi 0, %s311
    %s331 = sphi 0, %s333
    %s334 = sphi 0, %s331
    %s335 = sphi 0, %s334
    %s351 = sphi 0, %s335
    %s357 = sphi 0, %s359
    %s360 = sphi 0, %s357
    %s361 = sphi 0, %s360
    %s377 = sphi 0, %s361
  $region4: #{flow_block_forward.1} parent=0 // loop_header_branch
    %25 = sbr.rel (%p23) target = $region8
  $region5: #{flow_block_forward.1} parent=0 // loop_body
    %s27 = ssub.s32 %s22, 1
    %s28 = ssub.s32 %s22, 2
    %s29 = sadd.s32 %s22, 1
    %s30 = ssub.s32 %s22, %s29
    %p31 = scmp.eq.s32.totalorder %s30, 0
    %s33 = sadd.s32 %s32, 1
    %s34 = scalar_select %p31, %s32, %s33
    %p37 = pneg %p31
    %p38 = scmp.eq.s32.totalorder %s22, 1
    %p39 = por %p37, %p38
    %p40 = scmp.ne.s32.totalorder %s32, %s35
    %p41 = scmp.eq.s32.totalorder %s22, 0
    %p42 = por %p40, %p41
    %p43 = scmp.ne.s32.totalorder %s32, %s35
    %p44 = scmp.eq.s32.totalorder %s27, 1
    %p45 = por %p43, %p44
    %p46 = scmp.ne.s32.totalorder %s35, %s36
    %p47 = scmp.eq.s32.totalorder %s27, 0
    %p48 = por %p46, %p47
    %p49 = scmp.ne.s32.totalorder %s35, %s36
    %p50 = scmp.eq.s32.totalorder %s28, 1
    %p51 = por %p49, %p50
    %p53 = scmp.ne.s32.totalorder %s36, %s52
    %p54 = scmp.eq.s32.totalorder %s28, 0
    %p55 = por %p53, %p54
    %s57 = sadd.s32 %s56, 1
    %p60 = scmp.eq.s32.totalorder %s22, 1
    %p61 = scmp.ne.s32.totalorder %s56, %s58
    %p62 = scmp.eq.s32.totalorder %s22, 0
    %p63 = por %p61, %p62
    %p64 = scmp.ne.s32.totalorder %s56, %s58
    %p65 = scmp.eq.s32.totalorder %s27, 1
    %p66 = por %p64, %p65
    %p67 = scmp.ne.s32.totalorder %s58, %s59
    %p68 = scmp.eq.s32.totalorder %s27, 0
    %p69 = por %p67, %p68
    %p70 = scmp.ne.s32.totalorder %s58, %s59
    %p71 = scmp.eq.s32.totalorder %s28, 1
    %p72 = por %p70, %p71
    %p74 = scmp.ne.s32.totalorder %s59, %s73
    %p75 = scmp.eq.s32.totalorder %s28, 0
    %p76 = por %p74, %p75
    %s78 = sadd.s32 %s77, 1
    %p81 = scmp.eq.s32.totalorder %s22, 1
    %p82 = scmp.ne.s32.totalorder %s77, %s79
    %p83 = scmp.eq.s32.totalorder %s22, 0
    %p84 = por %p82, %p83
    %p85 = scmp.ne.s32.totalorder %s77, %s79
    %p86 = scmp.eq.s32.totalorder %s27, 1
    %p87 = por %p85, %p86
    %p88 = scmp.ne.s32.totalorder %s79, %s80
    %p89 = scmp.eq.s32.totalorder %s27, 0
    %p90 = por %p88, %p89
    %p91 = scmp.ne.s32.totalorder %s79, %s80
    %p92 = scmp.eq.s32.totalorder %s28, 1
    %p93 = por %p91, %p92
    %p95 = scmp.ne.s32.totalorder %s80, %s94
    %p96 = scmp.eq.s32.totalorder %s28, 0
    %p97 = por %p95, %p96
    %s99 = sadd.s32 %s98, 1
    %p102 = scmp.eq.s32.totalorder %s22, 1
    %p103 = scmp.ne.s32.totalorder %s98, %s100
    %p104 = scmp.eq.s32.totalorder %s22, 0
    %p105 = por %p103, %p104
    %p106 = scmp.ne.s32.totalorder %s98, %s100
    %p107 = scmp.eq.s32.totalorder %s27, 1
    %p108 = por %p106, %p107
    %p109 = scmp.ne.s32.totalorder %s100, %s101
    %p110 = scmp.eq.s32.totalorder %s27, 0
    %p111 = por %p109, %p110
    %p112 = scmp.ne.s32.totalorder %s100, %s101
    %p113 = scmp.eq.s32.totalorder %s28, 1
    %p114 = por %p112, %p113
    %p116 = scmp.ne.s32.totalorder %s101, %s115
    %p117 = scmp.eq.s32.totalorder %s28, 0
    %p118 = por %p116, %p117
    %s120 = sadd.s32 %s119, 1
    %p123 = scmp.eq.s32.totalorder %s22, 1
    %p124 = scmp.ne.s32.totalorder %s119, %s121
    %p125 = scmp.eq.s32.totalorder %s22, 0
    %p126 = por %p124, %p125
    %p127 = scmp.ne.s32.totalorder %s119, %s121
    %p128 = scmp.eq.s32.totalorder %s27, 1
    %p129 = por %p127, %p128
    %p130 = scmp.ne.s32.totalorder %s121, %s122
    %p131 = scmp.eq.s32.totalorder %s27, 0
    %p132 = por %p130, %p131
    %p133 = scmp.ne.s32.totalorder %s121, %s122
    %p134 = scmp.eq.s32.totalorder %s28, 1
    %p135 = por %p133, %p134
    %p137 = scmp.ne.s32.totalorder %s122, %s136
    %p138 = scmp.eq.s32.totalorder %s28, 0
    %p139 = por %p137, %p138
    %s141 = sadd.s32 %s140, 1
    %p144 = scmp.eq.s32.totalorder %s22, 1
    %p145 = scmp.ne.s32.totalorder %s140, %s142
    %p146 = scmp.eq.s32.totalorder %s22, 0
    %p147 = por %p145, %p146
    %p148 = scmp.ne.s32.totalorder %s140, %s142
    %p149 = scmp.eq.s32.totalorder %s27, 1
    %p150 = por %p148, %p149
    %p151 = scmp.ne.s32.totalorder %s142, %s143
    %p152 = scmp.eq.s32.totalorder %s27, 0
    %p153 = por %p151, %p152
    %p154 = scmp.ne.s32.totalorder %s142, %s143
    %p155 = scmp.eq.s32.totalorder %s28, 1
    %p156 = por %p154, %p155
    %p158 = scmp.ne.s32.totalorder %s143, %s157
    %p159 = scmp.eq.s32.totalorder %s28, 0
    %p160 = por %p158, %p159
    %s162 = sadd.s32 %s161, 1
    %p165 = scmp.eq.s32.totalorder %s22, 1
    %p166 = scmp.ne.s32.totalorder %s161, %s163
    %p167 = scmp.eq.s32.totalorder %s22, 0
    %p168 = por %p166, %p167
    %p169 = scmp.ne.s32.totalorder %s161, %s163
    %p170 = scmp.eq.s32.totalorder %s27, 1
    %p171 = por %p169, %p170
    %p172 = scmp.ne.s32.totalorder %s163, %s164
    %p173 = scmp.eq.s32.totalorder %s27, 0
    %p174 = por %p172, %p173
    %p175 = scmp.ne.s32.totalorder %s163, %s164
    %p176 = scmp.eq.s32.totalorder %s28, 1
    %p177 = por %p175, %p176
    %p179 = scmp.ne.s32.totalorder %s164, %s178
    %p180 = scmp.eq.s32.totalorder %s28, 0
    %p181 = por %p179, %p180
    %s183 = sadd.s32 %s182, 1
    %p186 = scmp.eq.s32.totalorder %s22, 1
    %p187 = scmp.ne.s32.totalorder %s182, %s184
    %p188 = scmp.eq.s32.totalorder %s22, 0
    %p189 = por %p187, %p188
    %p190 = scmp.ne.s32.totalorder %s182, %s184
    %p191 = scmp.eq.s32.totalorder %s27, 1
    %p192 = por %p190, %p191
    %p193 = scmp.ne.s32.totalorder %s184, %s185
    %p194 = scmp.eq.s32.totalorder %s27, 0
    %p195 = por %p193, %p194
    %p196 = scmp.ne.s32.totalorder %s184, %s185
    %p197 = scmp.eq.s32.totalorder %s28, 1
    %p198 = por %p196, %p197
    %p200 = scmp.ne.s32.totalorder %s185, %s199
    %p201 = scmp.eq.s32.totalorder %s28, 0
    %p202 = por %p200, %p201
    %s204 = sadd.s32 %s203, 1
    %p207 = scmp.eq.s32.totalorder %s22, 1
    %p208 = scmp.ne.s32.totalorder %s203, %s205
    %p209 = scmp.eq.s32.totalorder %s22, 0
    %p210 = por %p208, %p209
    %p211 = scmp.ne.s32.totalorder %s203, %s205
    %p212 = scmp.eq.s32.totalorder %s27, 1
    %p213 = por %p211, %p212
    %p214 = scmp.ne.s32.totalorder %s205, %s206
    %p215 = scmp.eq.s32.totalorder %s27, 0
    %p216 = por %p214, %p215
    %p217 = scmp.ne.s32.totalorder %s205, %s206
    %p218 = scmp.eq.s32.totalorder %s28, 1
    %p219 = por %p217, %p218
    %p221 = scmp.ne.s32.totalorder %s206, %s220
    %p222 = scmp.eq.s32.totalorder %s28, 0
    %p223 = por %p221, %p222
    %s225 = sadd.s32 %s224, 1
    %p228 = scmp.eq.s32.totalorder %s22, 1
    %p229 = scmp.ne.s32.totalorder %s224, %s226
    %p230 = scmp.eq.s32.totalorder %s22, 0
    %p231 = por %p229, %p230
    %p232 = scmp.ne.s32.totalorder %s224, %s226
    %p233 = scmp.eq.s32.totalorder %s27, 1
    %p234 = por %p232, %p233
    %p235 = scmp.ne.s32.totalorder %s226, %s227
    %p236 = scmp.eq.s32.totalorder %s27, 0
    %p237 = por %p235, %p236
    %p238 = scmp.ne.s32.totalorder %s226, %s227
    %p239 = scmp.eq.s32.totalorder %s28, 1
    %p240 = por %p238, %p239
    %p242 = scmp.ne.s32.totalorder %s227, %s241
    %p243 = scmp.eq.s32.totalorder %s28, 0
    %p244 = por %p242, %p243
    %s246 = sadd.s32 %s245, 1
    %p249 = scmp.eq.s32.totalorder %s22, 1
    %p250 = scmp.ne.s32.totalorder %s245, %s247
    %p251 = scmp.eq.s32.totalorder %s22, 0
    %p252 = por %p250, %p251
    %p253 = scmp.ne.s32.totalorder %s245, %s247
    %p254 = scmp.eq.s32.totalorder %s27, 1
    %p255 = por %p253, %p254
    %p256 = scmp.ne.s32.totalorder %s247, %s248
    %p257 = scmp.eq.s32.totalorder %s27, 0
    %p258 = por %p256, %p257
    %p259 = scmp.ne.s32.totalorder %s247, %s248
    %p260 = scmp.eq.s32.totalorder %s28, 1
    %p261 = por %p259, %p260
    %p263 = scmp.ne.s32.totalorder %s248, %s262
    %p264 = scmp.eq.s32.totalorder %s28, 0
    %p265 = por %p263, %p264
    %s267 = sadd.s32 %s266, 1
    %p270 = scmp.eq.s32.totalorder %s22, 1
    %p271 = scmp.ne.s32.totalorder %s266, %s268
    %p272 = scmp.eq.s32.totalorder %s22, 0
    %p273 = por %p271, %p272
    %p274 = scmp.ne.s32.totalorder %s266, %s268
    %p275 = scmp.eq.s32.totalorder %s27, 1
    %p276 = por %p274, %p275
    %p277 = scmp.ne.s32.totalorder %s268, %s269
    %p278 = scmp.eq.s32.totalorder %s27, 0
    %p279 = por %p277, %p278
    %p280 = scmp.ne.s32.totalorder %s268, %s269
    %p281 = scmp.eq.s32.totalorder %s28, 1
    %p282 = por %p280, %p281
    %p284 = scmp.ne.s32.totalorder %s269, %s283
    %p285 = scmp.eq.s32.totalorder %s28, 0
    %p286 = por %p284, %p285
    %s288 = sadd.s32 %s287, 1
    %p291 = scmp.eq.s32.totalorder %s22, 1
    %p292 = scmp.ne.s32.totalorder %s287, %s289
    %p293 = scmp.eq.s32.totalorder %s22, 0
    %p294 = por %p292, %p293
    %p295 = scmp.ne.s32.totalorder %s287, %s289
    %p296 = scmp.eq.s32.totalorder %s27, 1
    %p297 = por %p295, %p296
    %p298 = scmp.ne.s32.totalorder %s289, %s290
    %p299 = scmp.eq.s32.totalorder %s27, 0
    %p300 = por %p298, %p299
    %p301 = scmp.ne.s32.totalorder %s289, %s290
    %p302 = scmp.eq.s32.totalorder %s28, 1
    %p303 = por %p301, %p302
    %p305 = scmp.ne.s32.totalorder %s290, %s304
    %p306 = scmp.eq.s32.totalorder %s28, 0
    %p307 = por %p305, %p306
    %s309 = sadd.s32 %s308, 1
    %p312 = scmp.eq.s32.totalorder %s22, 1
    %p313 = scmp.ne.s32.totalorder %s308, %s310
    %p314 = scmp.eq.s32.totalorder %s22, 0
    %p315 = por %p313, %p314
    %p316 = scmp.ne.s32.totalorder %s308, %s310
    %p317 = scmp.eq.s32.totalorder %s27, 1
    %p318 = por %p316, %p317
    %p319 = scmp.ne.s32.totalorder %s310, %s311
    %p320 = scmp.eq.s32.totalorder %s27, 0
    %p321 = por %p319, %p320
    %p322 = scmp.ne.s32.totalorder %s310, %s311
    %p323 = scmp.eq.s32.totalorder %s28, 1
    %p324 = por %p322, %p323
    %p326 = scmp.ne.s32.totalorder %s311, %s325
    %p327 = scmp.eq.s32.totalorder %s28, 0
    %p328 = por %p326, %p327
    %s329 = ssub.s32 %s22, %s29
    %p330 = scmp.eq.s32.totalorder %s329, 0
    %s332 = sadd.s32 %s331, 1
    %s333 = scalar_select %p330, %s331, %s332
    %p336 = pneg %p330
    %p337 = scmp.eq.s32.totalorder %s22, 1
    %p338 = por %p336, %p337
    %p339 = scmp.ne.s32.totalorder %s331, %s334
    %p340 = scmp.eq.s32.totalorder %s22, 0
    %p341 = por %p339, %p340
    %p342 = scmp.ne.s32.totalorder %s331, %s334
    %p343 = scmp.eq.s32.totalorder %s27, 1
    %p344 = por %p342, %p343
    %p345 = scmp.ne.s32.totalorder %s334, %s335
    %p346 = scmp.eq.s32.totalorder %s27, 0
    %p347 = por %p345, %p346
    %p348 = scmp.ne.s32.totalorder %s334, %s335
    %p349 = scmp.eq.s32.totalorder %s28, 1
    %p350 = por %p348, %p349
    %p352 = scmp.ne.s32.totalorder %s335, %s351
    %p353 = scmp.eq.s32.totalorder %s28, 0
    %p354 = por %p352, %p353
    %s355 = ssub.s32 %s22, %s29
    %p356 = scmp.eq.s32.totalorder %s355, 0
    %s358 = sadd.s32 %s357, 1
    %s359 = scalar_select %p356, %s357, %s358
    %p362 = pneg %p356
    %p363 = scmp.eq.s32.totalorder %s22, 1
    %p364 = por %p362, %p363
    %p365 = scmp.ne.s32.totalorder %s357, %s360
    %p366 = scmp.eq.s32.totalorder %s22, 0
    %p367 = por %p365, %p366
    %p368 = scmp.ne.s32.totalorder %s357, %s360
    %p369 = scmp.eq.s32.totalorder %s27, 1
    %p370 = por %p368, %p369
    %p371 = scmp.ne.s32.totalorder %s360, %s361
    %p372 = scmp.eq.s32.totalorder %s27, 0
    %p373 = por %p371, %p372
    %p374 = scmp.ne.s32.totalorder %s360, %s361
    %p375 = scmp.eq.s32.totalorder %s28, 1
    %p376 = por %p374, %p375
    %p378 = scmp.ne.s32.totalorder %s361, %s377
    %p379 = scmp.eq.s32.totalorder %s28, 0
    %p380 = por %p378, %p379
    %p381 = scmp.le.s32.totalorder 1, %s22
    %p382 = scmp.lt.s32.totalorder %s22, 3
    %p383 = pnand %p381, %p382
    %p384 = pneg %p383
    // Predicated region
    $region9: #{flow_block_forward.1} parent=5 // pred_check
      _
    $region10: #{flow_block_forward.1} parent=5 // pred_check_branch
      %386 = sbr.rel (%p383) target = $region12
    $region11: #{flow_block_forward.1} parent=5 // pred_region
      %s387 = ssub.s32 %s22, 1
      // Predicated region
      $region13: #{flow_block_forward.1} parent=11 // pred_check
        %p388 = pneg %p69
      $region14: #{flow_block_forward.1} parent=11 // pred_check_branch
        %390 = sbr.rel (%p388) target = $region16
      $region15: #{flow_block_forward.1} parent=11 // pred_region
        _
      $region16: #{flow_block_forward.1} parent=11 // pred_fallthru
        _
      // Predicated region
      $region17: #{flow_block_forward.1} parent=11 // pred_check
        %p391 = pneg %p90
      $region18: #{flow_block_forward.1} parent=11 // pred_check_branch
        %393 = sbr.rel (%p391) target = $region20
      $region19: #{flow_block_forward.1} parent=11 // pred_region
        _
      $region20: #{flow_block_forward.1} parent=11 // pred_fallthru
        _
      // Predicated region
      $region21: #{flow_block_forward.1} parent=11 // pred_check
        %p394 = pneg %p111
      $region22: #{flow_block_forward.1} parent=11 // pred_check_branch
        %396 = sbr.rel (%p394) target = $region24
      $region23: #{flow_block_forward.1} parent=11 // pred_region
        _
      $region24: #{flow_block_forward.1} parent=11 // pred_fallthru
        _
      // Predicated region
      $region25: #{flow_block_forward.1} parent=11 // pred_check
        %p397 = pneg %p132
      $region26: #{flow_block_forward.1} parent=11 // pred_check_branch
        %399 = sbr.rel (%p397) target = $region28
      $region27: #{flow_block_forward.1} parent=11 // pred_region
        _
      $region28: #{flow_block_forward.1} parent=11 // pred_fallthru
        _
      // Predicated region
      $region29: #{flow_block_forward.1} parent=11 // pred_check
        %p400 = pneg %p153
      $region30: #{flow_block_forward.1} parent=11 // pred_check_branch
        %402 = sbr.rel (%p400) target = $region32
      $region31: #{flow_block_forward.1} parent=11 // pred_region
        _
      $region32: #{flow_block_forward.1} parent=11 // pred_fallthru
        _
      // Predicated region
      $region33: #{flow_block_forward.1} parent=11 // pred_check
        %p403 = pneg %p174
      $region34: #{flow_block_forward.1} parent=11 // pred_check_branch
        %405 = sbr.rel (%p403) target = $region36
      $region35: #{flow_block_forward.1} parent=11 // pred_region
        _
      $region36: #{flow_block_forward.1} parent=11 // pred_fallthru
        _
      // Predicated region
      $region37: #{flow_block_forward.1} parent=11 // pred_check
        %p406 = pneg %p195
      $region38: #{flow_block_forward.1} parent=11 // pred_check_branch
        %408 = sbr.rel (%p406) target = $region40
      $region39: #{flow_block_forward.1} parent=11 // pred_region
        _
      $region40: #{flow_block_forward.1} parent=11 // pred_fallthru
        _
      // Predicated region
      $region41: #{flow_block_forward.1} parent=11 // pred_check
        %p409 = pneg %p216
      $region42: #{flow_block_forward.1} parent=11 // pred_check_branch
        %411 = sbr.rel (%p409) target = $region44
      $region43: #{flow_block_forward.1} parent=11 // pred_region
        _
      $region44: #{flow_block_forward.1} parent=11 // pred_fallthru
        _
      // Predicated region
      $region45: #{flow_block_forward.1} parent=11 // pred_check
        %p412 = pneg %p237
      $region46: #{flow_block_forward.1} parent=11 // pred_check_branch
        %414 = sbr.rel (%p412) target = $region48
      $region47: #{flow_block_forward.1} parent=11 // pred_region
        _
      $region48: #{flow_block_forward.1} parent=11 // pred_fallthru
        _
      // Predicated region
      $region49: #{flow_block_forward.1} parent=11 // pred_check
        %p415 = pneg %p258
      $region50: #{flow_block_forward.1} parent=11 // pred_check_branch
        %417 = sbr.rel (%p415) target = $region52
      $region51: #{flow_block_forward.1} parent=11 // pred_region
        _
      $region52: #{flow_block_forward.1} parent=11 // pred_fallthru
        _
      // Predicated region
      $region53: #{flow_block_forward.1} parent=11 // pred_check
        %p418 = pneg %p279
      $region54: #{flow_block_forward.1} parent=11 // pred_check_branch
        %420 = sbr.rel (%p418) target = $region56
      $region55: #{flow_block_forward.1} parent=11 // pred_region
        _
      $region56: #{flow_block_forward.1} parent=11 // pred_fallthru
        _
      // Predicated region
      $region57: #{flow_block_forward.1} parent=11 // pred_check
        %p421 = pneg %p300
      $region58: #{flow_block_forward.1} parent=11 // pred_check_branch
        %423 = sbr.rel (%p421) target = $region60
      $region59: #{flow_block_forward.1} parent=11 // pred_region
        _
      $region60: #{flow_block_forward.1} parent=11 // pred_fallthru
        _
      // Predicated region
      $region61: #{flow_block_forward.1} parent=11 // pred_check
        %p424 = pneg %p321
      $region62: #{flow_block_forward.1} parent=11 // pred_check_branch
        %426 = sbr.rel (%p424) target = $region64
      $region63: #{flow_block_forward.1} parent=11 // pred_region
        _
      $region64: #{flow_block_forward.1} parent=11 // pred_fallthru
        _
    $region12: #{flow_block_forward.1} parent=5 // pred_fallthru
      _
    %p427 = scmp.lt.s32.totalorder %s22, 2
    // Predicated region
    $region65: #{flow_block_forward.1} parent=5 // pred_check
      %p428 = pneg %p427
    $region66: #{flow_block_forward.1} parent=5 // pred_check_branch
      %430 = sbr.rel (%p428) target = $region68
    $region67: #{flow_block_forward.1} parent=5 // pred_region
      // Predicated region
      $region69: #{flow_block_forward.1} parent=67 // pred_check
        %p431 = pneg %p42
      $region70: #{flow_block_forward.1} parent=67 // pred_check_branch
        %433 = sbr.rel (%p431) target = $region72
      $region71: #{flow_block_forward.1} parent=67 // pred_region
        %p434 = scmp.lt.s32.totalorder %s22, 1
        %s435 = scalar_select %p434, %s22, 1
        %s436 = smul.addr %s435, 4
        %s437 = smul.addr %s436, 8
        %s438 = scalar_lea.vmem %s0, %s437
      $region72: #{flow_block_forward.1} parent=67 // pred_fallthru
        _
    $region68: #{flow_block_forward.1} parent=5 // pred_fallthru
      _
    %p439 = scmp.le.s32.totalorder 1, %s22
    %p440 = scmp.lt.s32.totalorder %s22, 3
    %p441 = pnand %p439, %p440
    %p442 = pneg %p441
    // Predicated region
    $region73: #{flow_block_forward.1} parent=5 // pred_check
      _
    $region74: #{flow_block_forward.1} parent=5 // pred_check_branch
      %444 = sbr.rel (%p441) target = $region76
    $region75: #{flow_block_forward.1} parent=5 // pred_region
      %s445 = ssub.s32 %s22, 1
      %p446 = scmp.lt.s32.totalorder %s27, 1
      %s447 = scalar_select %p446, %s27, 1
      %s448 = smul.addr %s447, 4
      %s449 = smul.addr %s448, 8
      %s450 = scalar_lea.vmem %s0, %s449
      %p451 = pneg %p48
      %p452 = pneg %p45
      %p453 = pneg %p69
      %p454 = pneg %p66
      %p455 = pneg %p90
      %p456 = pneg %p87
      %p457 = pneg %p111
      %p458 = pneg %p108
      %p459 = pneg %p132
      %p460 = pneg %p129
      %p461 = pneg %p153
      %p462 = pneg %p150
      %p463 = pneg %p174
      %p464 = pneg %p171
      %p465 = pneg %p195
      %p466 = pneg %p192
      %p467 = pneg %p216
      %p468 = pneg %p213
      %p469 = pneg %p237
      %p470 = pneg %p234
      %p471 = pneg %p258
      %p472 = pneg %p255
      %p473 = pneg %p279
      %p474 = pneg %p276
      %p475 = pneg %p300
      %p476 = pneg %p297
      %p477 = pneg %p321
      %p478 = pneg %p318
      %p479 = pneg %p347
      %p480 = pneg %p344
      %p481 = scmp.lt.s32.totalorder %s27, 1
      %s482 = scalar_select %p481, %s27, 1
      %s483 = smul.addr %s482, 4
      %s484 = smul.addr %s483, 8
      %s485 = scalar_lea.vmem %s14, %s484
      %p486 = pneg %p373
      %p487 = pneg %p370
      %p488 = scmp.lt.s32.totalorder %s27, 1
      %s489 = scalar_select %p488, %s27, 1
      %s490 = smul.addr %s489, 2
      %s491 = scalar_lea.vmem %s15, %s490
      %p492 = scmp.lt.s32.totalorder %s27, 1
      %s493 = scalar_select %p492, %s27, 1
      %s494 = smul.addr %s493, 4
      %s495 = smul.addr %s494, 8
      %s496 = scalar_lea.vmem %s0, %s495
      %p497 = scmp.lt.s32.totalorder %s27, 1
      %s498 = scalar_select %p497, %s27, 1
      %s499 = smul.addr %s498, 4
      %s500 = smul.addr %s499, 8
      %s501 = scalar_lea.vmem %s14, %s500
      %p502 = scmp.lt.s32.totalorder %s27, 1
      %s503 = scalar_select %p502, %s27, 1
      %s504 = smul.addr %s503, 2
      %s505 = scalar_lea.vmem %s15, %s504
      %v507 = vld [vmem:[%s496] sm:$0xff]
      %v508 = vld [vmem:[%s496 + $0x8] sm:$0xff]
      %v509 = vld [vmem:[%s496 + $0x10] sm:$0xff]
      %v510 = vld [vmem:[%s496 + $0x18] sm:$0xff]
      %v511 = vld [vmem:[%s1] sm:$0xf]
      %v512 = vld [vmem:[%s1 + $0x4] sm:$0xf]
      %v513 = vpack.c.bf16 %v509, %v507
      %v514 = vpack.c.bf16 %v510, %v508
      %v515 = vld [vmem:[%s2] sm:$0xff]
      %v516 = vld [vmem:[%s2 + $0x8] sm:$0xff]
      %518 = vset.pattern.permute.xlu0 0
      %519 = vperm.xlu0 %518, %v515
      %v520 = vpop.permute.xlu0 %519
      %523 = vset.pattern.permute.xlu0 0
      %524 = vperm.xlu0 %523, %v516
      %v525 = vpop.permute.xlu0 %524
      %v529 = vunpack.c.l.b16 %v511
      %v530 = vunpack.c.l.b16 %v512
      %v531 = vpack.c.b16 %v530, %v529
      %vm532 = vcmask 130048
      %v534 = vsel %vm532, %v531, 0
      %536 = vmatpush.bf16.msra.mxu0 0
      %537 = vmatpush.bf16.msra.mxu0 0
      %538 = vmatpush.bf16.msra.mxu0 0
      %539 = vmatpush.bf16.msra.mxu0 0
      %540 = vmatpush.bf16.msra.mxu0 0
      %541 = vmatpush.bf16.msra.mxu0 0
      %542 = vmatpush.bf16.msra.mxu0 0
      %543 = vmatpush.bf16.msra.mxu0 %v513
      %544 = vmatmul.bf16.gmra.mxu0 %v534
      %v545 = vpop.f32.mrf.mxu0
      %v546 = vadd.f32 %v520, %v545
      %v547 = vpop.f32.mrf.mxu0
      %v548 = vadd.f32 %v525, %v547
      %549 = vdwg.mxu0
      %550 = vmatpush.bf16.msra.mxu0 0
      %551 = vmatpush.bf16.msra.mxu0 0
      %552 = vmatpush.bf16.msra.mxu0 0
      %553 = vmatpush.bf16.msra.mxu0 0
      %554 = vmatpush.bf16.msra.mxu0 0
      %555 = vmatpush.bf16.msra.mxu0 0
      %556 = vmatpush.bf16.msra.mxu0 0
      %557 = vmatpush.bf16.msra.mxu0 %v514
      %558 = vmatmul.bf16.gmra.mxu0 %v534
      %v559 = vpop.f32.mrf.mxu0
      %v560 = vadd.f32 %v520, %v559
      %v561 = vpop.f32.mrf.mxu0
      %v562 = vadd.f32 %v525, %v561
      %563 = vdwg.mxu0
      %v564 = vld [vmem:[%s6] sm:$0xf]
      %v565 = vld [vmem:[%s6 + $0x4] sm:$0xf]
      %v566 = vld [vmem:[%s6 + $0x8] sm:$0xf]
      %v567 = vld [vmem:[%s6 + $0xc] sm:$0xf]
      %v568 = vld [vmem:[%s7] sm:$0xff]
      %v569 = vld [vmem:[%s7 + $0x8] sm:$0xff]
      %v570 = vld [vmem:[%s7 + $0x10] sm:$0xff]
      %v571 = vld [vmem:[%s7 + $0x18] sm:$0xff]
      %v572 = vld [vmem:[%s8] sm:$0xf]
      %v573 = vld [vmem:[%s8 + $0x4] sm:$0xf]
      %v574 = vld [vmem:[%s9] sm:$0xff]
      %v575 = vld [vmem:[%s9 + $0x8] sm:$0xff]
      %v576 = vpack.c.bf16 %v548, %v548
      %v577 = vpack.c.bf16 %v562, %v562
      %579 = vset.pattern.permute.xlu0 0
      %580 = vperm.xlu0 %579, %v568
      %v581 = vpop.permute.xlu0 %580
      %584 = vset.pattern.permute.xlu0 0
      %585 = vperm.xlu0 %584, %v569
      %v586 = vpop.permute.xlu0 %585
      %589 = vset.pattern.permute.xlu0 0
      %590 = vperm.xlu0 %589, %v570
      %v591 = vpop.permute.xlu0 %590
      %594 = vset.pattern.permute.xlu0 0
      %595 = vperm.xlu0 %594, %v571
      %v596 = vpop.permute.xlu0 %595
      %v602 = vunpack.c.l.b16 %v564
      %v603 = vunpack.c.l.b16 %v565
      %v604 = vunpack.c.l.b16 %v566
      %v605 = vunpack.c.l.b16 %v567
      %v606 = vpack.c.b16 %v603, %v602
      %v607 = vpack.c.b16 %v605, %v604
      %vm608 = vcmask 64512
      %v610 = vsel %vm608, %v606, 0
      %v613 = vsel %vm608, %v607, 0
      %vm615 = vcmask 1043456
      %v617 = vsel %vm615, %v576, 0
      %v620 = vsel %vm615, %v577, 0
      %622 = vmatpush.bf16.msra.mxu0 0
      %623 = vmatpush.bf16.msra.mxu0 0
      %624 = vmatpush.bf16.msra.mxu0 0
      %625 = vmatpush.bf16.msra.mxu0 0
      %626 = vmatpush.bf16.msra.mxu0 0
      %627 = vmatpush.bf16.msra.mxu0 0
      %628 = vmatpush.bf16.msra.mxu0 0
      %629 = vmatpush.bf16.msra.mxu0 %v617
      %630 = vmatmul.bf16.gmra.mxu0 %v610
      %v631 = vpop.f32.mrf.mxu0
      %v632 = vadd.f32 %v581, %v631
      %v633 = vpop.f32.mrf.mxu0
      %v634 = vadd.f32 %v586, %v633
      %635 = vmatmul.bf16.gmra.mxu0 %v613
      %v636 = vpop.f32.mrf.mxu0
      %v637 = vadd.f32 %v591, %v636
      %v638 = vpop.f32.mrf.mxu0
      %v639 = vadd.f32 %v596, %v638
      %640 = vdwg.mxu0
      %641 = vmatpush.bf16.msra.mxu0 0
      %642 = vmatpush.bf16.msra.mxu0 0
      %643 = vmatpush.bf16.msra.mxu0 0
      %644 = vmatpush.bf16.msra.mxu0 0
      %645 = vmatpush.bf16.msra.mxu0 0
      %646 = vmatpush.bf16.msra.mxu0 0
      %647 = vmatpush.bf16.msra.mxu0 0
      %648 = vmatpush.bf16.msra.mxu0 %v620
      %649 = vmatmul.bf16.gmra.mxu0 %v610
      %v650 = vpop.f32.mrf.mxu0
      %v651 = vadd.f32 %v581, %v650
      %v652 = vpop.f32.mrf.mxu0
      %v653 = vadd.f32 %v586, %v652
      %654 = vmatmul.bf16.gmra.mxu0 %v613
      %v655 = vpop.f32.mrf.mxu0
      %v656 = vadd.f32 %v591, %v655
      %v657 = vpop.f32.mrf.mxu0
      %v658 = vadd.f32 %v596, %v657
      %659 = vdwg.mxu0
      %v660 = vmax.f32 %v632, 0.0
      %v661 = vmax.f32 %v651, 0.0
      %v662 = vmax.f32 %v634, 0.0
      %v663 = vmax.f32 %v653, 0.0
      %v664 = vmax.f32 %v637, 0.0
      %v665 = vmax.f32 %v656, 0.0
      %v666 = vmax.f32 %v639, 0.0
      %v667 = vmax.f32 %v658, 0.0
      %v668 = vpack.c.bf16 %v662, %v660
      %v669 = vpack.c.bf16 %v663, %v661
      %v670 = vpack.c.bf16 %v666, %v664
      %v671 = vpack.c.bf16 %v667, %v665
      %673 = vset.pattern.permute.xlu0 0
      %674 = vperm.xlu0 %673, %v574
      %v675 = vpop.permute.xlu0 %674
      %678 = vset.pattern.permute.xlu0 0
      %679 = vperm.xlu0 %678, %v575
      %v680 = vpop.permute.xlu0 %679
      %v684 = vunpack.c.l.b16 %v572
      %v685 = vunpack.c.l.b16 %v573
      %v686 = vpack.c.b16 %v685, %v684
      %vm687 = vcmask 261120
      %v689 = vsel %vm687, %v686, 0
      %691 = vmatpush.bf16.msra.mxu0 0
      %692 = vmatpush.bf16.msra.mxu0 0
      %693 = vmatpush.bf16.msra.mxu0 0
      %694 = vmatpush.bf16.msra.mxu0 0
      %695 = vmatpush.bf16.msra.mxu0 0
      %696 = vmatpush.bf16.msra.mxu0 0
      %697 = vmatpush.bf16.msra.mxu0 %v670
      %698 = vmatpush.bf16.msra.mxu0 %v668
      %699 = vmatmul.bf16.gmra.mxu0 %v689
      %v700 = vpop.f32.mrf.mxu0
      %v701 = vadd.f32 %v675, %v700
      %v702 = vpop.f32.mrf.mxu0
      %v703 = vadd.f32 %v680, %v702
      %704 = vdwg.mxu0
      %705 = vmatpush.bf16.msra.mxu0 0
      %706 = vmatpush.bf16.msra.mxu0 0
      %707 = vmatpush.bf16.msra.mxu0 0
      %708 = vmatpush.bf16.msra.mxu0 0
      %709 = vmatpush.bf16.msra.mxu0 0
      %710 = vmatpush.bf16.msra.mxu0 0
      %711 = vmatpush.bf16.msra.mxu0 %v671
      %712 = vmatpush.bf16.msra.mxu0 %v669
      %713 = vmatmul.bf16.gmra.mxu0 %v689
      %v714 = vpop.f32.mrf.mxu0
      %v715 = vadd.f32 %v675, %v714
      %v716 = vpop.f32.mrf.mxu0
      %v717 = vadd.f32 %v680, %v716
      %718 = vdwg.mxu0
      %v719 = vmul.f32 %v701, 0.5
      %v720 = vmul.f32 %v715, 0.5
      %v721 = vtanh.pop %v719
      %v722 = vtanh.pop %v720
      %v723 = vmul.f32 %v721, 2.0
      %v724 = vmul.f32 %v722, 2.0
      %v725 = vmul.f32 %v723, 1.442695
      %v726 = vpow.pop %v725
      %v727 = vmul.f32 %v724, 1.442695
      %v728 = vpow.pop %v727
      %v729 = vmul.f32 %v726, %v546
      %v730 = vmul.f32 %v728, %v560
      %v731 = vadd.f32 %v729, %v703
      %v732 = vadd.f32 %v730, %v717
      %v733 = vadd.f32 %v723, 0.0
      %v734 = vadd.f32 %v724, 0.0
      %v735 = vld [vmem:[%s10] sm:$0xf]
      %v736 = vld [vmem:[%s10 + $0x4] sm:$0xf]
      %v737 = vld [vmem:[%s10 + $0x8] sm:$0xf]
      %v738 = vld [vmem:[%s10 + $0xc] sm:$0xf]
      %v739 = vld [vmem:[%s11] sm:$0xff]
      %v740 = vld [vmem:[%s11 + $0x8] sm:$0xff]
      %v741 = vld [vmem:[%s11 + $0x10] sm:$0xff]
      %v742 = vld [vmem:[%s11 + $0x18] sm:$0xff]
      %v743 = vld [vmem:[%s12] sm:$0xf]
      %v744 = vld [vmem:[%s12 + $0x4] sm:$0xf]
      %v745 = vld [vmem:[%s13] sm:$0xff]
      %v746 = vld [vmem:[%s13 + $0x8] sm:$0xff]
      %v747 = vpack.c.bf16 %v731, %v731
      %v748 = vpack.c.bf16 %v732, %v732
      %750 = vset.pattern.permute.xlu0 0
      %751 = vperm.xlu0 %750, %v739
      %v752 = vpop.permute.xlu0 %751
      %755 = vset.pattern.permute.xlu0 0
      %756 = vperm.xlu0 %755, %v740
      %v757 = vpop.permute.xlu0 %756
      %760 = vset.pattern.permute.xlu0 0
      %761 = vperm.xlu0 %760, %v741
      %v762 = vpop.permute.xlu0 %761
      %765 = vset.pattern.permute.xlu0 0
      %766 = vperm.xlu0 %765, %v742
      %v767 = vpop.permute.xlu0 %766
      %v773 = vunpack.c.l.b16 %v735
      %v774 = vunpack.c.l.b16 %v736
      %v775 = vunpack.c.l.b16 %v737
      %v776 = vunpack.c.l.b16 %v738
      %v777 = vpack.c.b16 %v774, %v773
      %v778 = vpack.c.b16 %v776, %v775
      %v780 = vsel %vm608, %v777, 0
      %v783 = vsel %vm608, %v778, 0
      %v786 = vsel %vm615, %v747, 0
      %v789 = vsel %vm615, %v748, 0
      %791 = vmatpush.bf16.msra.mxu0 0
      %792 = vmatpush.bf16.msra.mxu0 0
      %793 = vmatpush.bf16.msra.mxu0 0
      %794 = vmatpush.bf16.msra.mxu0 0
      %795 = vmatpush.bf16.msra.mxu0 0
      %796 = vmatpush.bf16.msra.mxu0 0
      %797 = vmatpush.bf16.msra.mxu0 0
      %798 = vmatpush.bf16.msra.mxu0 %v786
      %799 = vmatmul.bf16.gmra.mxu0 %v780
      %v800 = vpop.f32.mrf.mxu0
      %v801 = vadd.f32 %v752, %v800
      %v802 = vpop.f32.mrf.mxu0
      %v803 = vadd.f32 %v757, %v802
      %804 = vmatmul.bf16.gmra.mxu0 %v783
      %v805 = vpop.f32.mrf.mxu0
      %v806 = vadd.f32 %v762, %v805
      %v807 = vpop.f32.mrf.mxu0
      %v808 = vadd.f32 %v767, %v807
      %809 = vdwg.mxu0
      %810 = vmatpush.bf16.msra.mxu0 0
      %811 = vmatpush.bf16.msra.mxu0 0
      %812 = vmatpush.bf16.msra.mxu0 0
      %813 = vmatpush.bf16.msra.mxu0 0
      %814 = vmatpush.bf16.msra.mxu0 0
      %815 = vmatpush.bf16.msra.mxu0 0
      %816 = vmatpush.bf16.msra.mxu0 0
      %817 = vmatpush.bf16.msra.mxu0 %v789
      %818 = vmatmul.bf16.gmra.mxu0 %v780
      %v819 = vpop.f32.mrf.mxu0
      %v820 = vadd.f32 %v752, %v819
      %v821 = vpop.f32.mrf.mxu0
      %v822 = vadd.f32 %v757, %v821
      %823 = vmatmul.bf16.gmra.mxu0 %v783
      %v824 = vpop.f32.mrf.mxu0
      %v825 = vadd.f32 %v762, %v824
      %v826 = vpop.f32.mrf.mxu0
      %v827 = vadd.f32 %v767, %v826
      %828 = vdwg.mxu0
      %v829 = vmax.f32 %v801, 0.0
      %v830 = vmax.f32 %v820, 0.0
      %v831 = vmax.f32 %v803, 0.0
      %v832 = vmax.f32 %v822, 0.0
      %v833 = vmax.f32 %v806, 0.0
      %v834 = vmax.f32 %v825, 0.0
      %v835 = vmax.f32 %v808, 0.0
      %v836 = vmax.f32 %v827, 0.0
      %v837 = vpack.c.bf16 %v831, %v829
      %v838 = vpack.c.bf16 %v832, %v830
      %v839 = vpack.c.bf16 %v835, %v833
      %v840 = vpack.c.bf16 %v836, %v834
      %842 = vset.pattern.permute.xlu0 0
      %843 = vperm.xlu0 %842, %v745
      %v844 = vpop.permute.xlu0 %843
      %847 = vset.pattern.permute.xlu0 0
      %848 = vperm.xlu0 %847, %v746
      %v849 = vpop.permute.xlu0 %848
      %v853 = vunpack.c.l.b16 %v743
      %v854 = vunpack.c.l.b16 %v744
      %v855 = vpack.c.b16 %v854, %v853
      %v857 = vsel %vm687, %v855, 0
      %859 = vmatpush.bf16.msra.mxu0 0
      %860 = vmatpush.bf16.msra.mxu0 0
      %861 = vmatpush.bf16.msra.mxu0 0
      %862 = vmatpush.bf16.msra.mxu0 0
      %863 = vmatpush.bf16.msra.mxu0 0
      %864 = vmatpush.bf16.msra.mxu0 0
      %865 = vmatpush.bf16.msra.mxu0 %v839
      %866 = vmatpush.bf16.msra.mxu0 %v837
      %867 = vmatmul.bf16.gmra.mxu0 %v857
      %v868 = vpop.f32.mrf.mxu0
      %v869 = vadd.f32 %v844, %v868
      %v870 = vpop.f32.mrf.mxu0
      %v871 = vadd.f32 %v849, %v870
      %872 = vdwg.mxu0
      %873 = vmatpush.bf16.msra.mxu0 0
      %874 = vmatpush.bf16.msra.mxu0 0
      %875 = vmatpush.bf16.msra.mxu0 0
      %876 = vmatpush.bf16.msra.mxu0 0
      %877 = vmatpush.bf16.msra.mxu0 0
      %878 = vmatpush.bf16.msra.mxu0 0
      %879 = vmatpush.bf16.msra.mxu0 %v840
      %880 = vmatpush.bf16.msra.mxu0 %v838
      %881 = vmatmul.bf16.gmra.mxu0 %v857
      %v882 = vpop.f32.mrf.mxu0
      %v883 = vadd.f32 %v844, %v882
      %v884 = vpop.f32.mrf.mxu0
      %v885 = vadd.f32 %v849, %v884
      %886 = vdwg.mxu0
      %v887 = vmul.f32 %v869, 0.5
      %v888 = vmul.f32 %v883, 0.5
      %v889 = vtanh.pop %v887
      %v890 = vtanh.pop %v888
      %v891 = vmul.f32 %v889, 2.0
      %v892 = vmul.f32 %v890, 2.0
      %v893 = vmul.f32 %v891, 1.442695
      %v894 = vpow.pop %v893
      %v895 = vmul.f32 %v892, 1.442695
      %v896 = vpow.pop %v895
      %v897 = vmul.f32 %v894, %v548
      %v898 = vmul.f32 %v896, %v562
      %v899 = vadd.f32 %v897, %v871
      %v900 = vadd.f32 %v898, %v885
      %v901 = vadd.f32 %v733, %v891
      %v902 = vadd.f32 %v734, %v892
      %v903 = vld [vmem:[%s3] sm:$0xf]
      %v904 = vld [vmem:[%s3 + $0x4] sm:$0xf]
      %v905 = vld [vmem:[%s4] sm:$0xf]
      %v906 = vld [vmem:[%s4 + $0x4] sm:$0xf]
      %v907 = vpack.c.bf16 %v899, %v899
      %v908 = vpack.c.bf16 %v900, %v900
      %v911 = vunpack.c.l.b16 %v905
      %v912 = vunpack.c.l.b16 %v906
      %v913 = vpack.c.b16 %v912, %v911
      %v915 = vsel %vm608, %v913, 0
      %v918 = vsel %vm615, %v907, 0
      %v921 = vsel %vm615, %v908, 0
      %923 = vmatpush.bf16.msra.mxu0 0
      %924 = vmatpush.bf16.msra.mxu0 0
      %925 = vmatpush.bf16.msra.mxu0 0
      %926 = vmatpush.bf16.msra.mxu0 0
      %927 = vmatpush.bf16.msra.mxu0 0
      %928 = vmatpush.bf16.msra.mxu0 0
      %929 = vmatpush.bf16.msra.mxu0 0
      %930 = vmatpush.bf16.msra.mxu0 %v918
      %931 = vmatmul.bf16.gmra.mxu0 %v915
      %v932 = vpop.f32.mrf.mxu0
      %v933 = vadd.f32 0.0, %v932
      %v934 = vpop.f32.mrf.mxu0
      %v935 = vadd.f32 0.0, %v934
      %936 = vdwg.mxu0
      %937 = vmatpush.bf16.msra.mxu0 0
      %938 = vmatpush.bf16.msra.mxu0 0
      %939 = vmatpush.bf16.msra.mxu0 0
      %940 = vmatpush.bf16.msra.mxu0 0
      %941 = vmatpush.bf16.msra.mxu0 0
      %942 = vmatpush.bf16.msra.mxu0 0
      %943 = vmatpush.bf16.msra.mxu0 0
      %944 = vmatpush.bf16.msra.mxu0 %v921
      %945 = vmatmul.bf16.gmra.mxu0 %v915
      %v946 = vpop.f32.mrf.mxu0
      %v947 = vadd.f32 0.0, %v946
      %v948 = vpop.f32.mrf.mxu0
      %v949 = vadd.f32 0.0, %v948
      %950 = vdwg.mxu0
      %v953 = vunpack.c.l.b16 %v903
      %v954 = vunpack.c.l.b16 %v904
      %v955 = vpack.c.b16 %v954, %v953
      %v957 = vsel %vm608, %v955, 0
      %959 = vmatpush.bf16.msra.mxu0 0
      %960 = vmatpush.bf16.msra.mxu0 0
      %961 = vmatpush.bf16.msra.mxu0 0
      %962 = vmatpush.bf16.msra.mxu0 0
      %963 = vmatpush.bf16.msra.mxu0 0
      %964 = vmatpush.bf16.msra.mxu0 0
      %965 = vmatpush.bf16.msra.mxu0 0
      %966 = vmatpush.bf16.msra.mxu0 %v786
      %967 = vmatmul.bf16.gmra.mxu0 %v957
      %v968 = vpop.f32.mrf.mxu0
      %v969 = vadd.f32 %v933, %v968
      %v970 = vpop.f32.mrf.mxu0
      %v971 = vadd.f32 %v935, %v970
      %972 = vdwg.mxu0
      %973 = vmatpush.bf16.msra.mxu0 0
      %974 = vmatpush.bf16.msra.mxu0 0
      %975 = vmatpush.bf16.msra.mxu0 0
      %976 = vmatpush.bf16.msra.mxu0 0
      %977 = vmatpush.bf16.msra.mxu0 0
      %978 = vmatpush.bf16.msra.mxu0 0
      %979 = vmatpush.bf16.msra.mxu0 0
      %980 = vmatpush.bf16.msra.mxu0 %v789
      %981 = vmatmul.bf16.gmra.mxu0 %v957
      %v982 = vpop.f32.mrf.mxu0
      %v983 = vadd.f32 %v947, %v982
      %v984 = vpop.f32.mrf.mxu0
      %v985 = vadd.f32 %v949, %v984
      %986 = vdwg.mxu0
      %v987 = vld [vmem:[%s5] sm:$0xff]
      %v988 = vld [vmem:[%s5 + $0x8] sm:$0xff]
      %990 = vset.pattern.permute.xlu0 0
      %991 = vperm.xlu0 %990, %v987
      %v992 = vpop.permute.xlu0 %991
      %995 = vset.pattern.permute.xlu0 0
      %996 = vperm.xlu0 %995, %v988
      %v997 = vpop.permute.xlu0 %996
      %v999 = vadd.f32 %v969, %v992
      %v1000 = vadd.f32 %v983, %v992
      %v1001 = vadd.f32 %v971, %v997
      %v1002 = vadd.f32 %v985, %v997
      %s1003 = scalar_lea.vmem %s6, 16
      %v1004 = vld [vmem:[%s1003] sm:$0xf]
      %v1005 = vld [vmem:[%s1003 + $0x4] sm:$0xf]
      %v1006 = vld [vmem:[%s1003 + $0x8] sm:$0xf]
      %v1007 = vld [vmem:[%s1003 + $0xc] sm:$0xf]
      %s1008 = scalar_lea.vmem %s7, 32
      %v1009 = vld [vmem:[%s1008] sm:$0xff]
      %v1010 = vld [vmem:[%s1008 + $0x8] sm:$0xff]
      %v1011 = vld [vmem:[%s1008 + $0x10] sm:$0xff]
      %v1012 = vld [vmem:[%s1008 + $0x18] sm:$0xff]
      %s1013 = scalar_lea.vmem %s8, 8
      %v1014 = vld [vmem:[%s1013] sm:$0xf]
      %v1015 = vld [vmem:[%s1013 + $0x4] sm:$0xf]
      %s1016 = scalar_lea.vmem %s9, 16
      %v1017 = vld [vmem:[%s1016] sm:$0xff]
      %v1018 = vld [vmem:[%s1016 + $0x8] sm:$0xff]
      %v1019 = vpack.c.bf16 %v1001, %v1001
      %v1020 = vpack.c.bf16 %v1002, %v1002
      %1022 = vset.pattern.permute.xlu0 0
      %1023 = vperm.xlu0 %1022, %v1009
      %v1024 = vpop.permute.xlu0 %1023
      %1027 = vset.pattern.permute.xlu0 0
      %1028 = vperm.xlu0 %1027, %v1010
      %v1029 = vpop.permute.xlu0 %1028
      %1032 = vset.pattern.permute.xlu0 0
      %1033 = vperm.xlu0 %1032, %v1011
      %v1034 = vpop.permute.xlu0 %1033
      %1037 = vset.pattern.permute.xlu0 0
      %1038 = vperm.xlu0 %1037, %v1012
      %v1039 = vpop.permute.xlu0 %1038
      %v1045 = vunpack.c.l.b16 %v1004
      %v1046 = vunpack.c.l.b16 %v1005
      %v1047 = vunpack.c.l.b16 %v1006
      %v1048 = vunpack.c.l.b16 %v1007
      %v1049 = vpack.c.b16 %v1046, %v1045
      %v1050 = vpack.c.b16 %v1048, %v1047
      %v1052 = vsel %vm608, %v1049, 0
      %v1055 = vsel %vm608, %v1050, 0
      %v1058 = vsel %vm615, %v1019, 0
      %v1061 = vsel %vm615, %v1020, 0
      %1063 = vmatpush.bf16.msra.mxu0 0
      %1064 = vmatpush.bf16.msra.mxu0 0
      %1065 = vmatpush.bf16.msra.mxu0 0
      %1066 = vmatpush.bf16.msra.mxu0 0
      %1067 = vmatpush.bf16.msra.mxu0 0
      %1068 = vmatpush.bf16.msra.mxu0 0
      %1069 = vmatpush.bf16.msra.mxu0 0
      %1070 = vmatpush.bf16.msra.mxu0 %v1058
      %1071 = vmatmul.bf16.gmra.mxu0 %v1052
      %v1072 = vpop.f32.mrf.mxu0
      %v1073 = vadd.f32 %v1024, %v1072
      %v1074 = vpop.f32.mrf.mxu0
      %v1075 = vadd.f32 %v1029, %v1074
      %1076 = vmatmul.bf16.gmra.mxu0 %v1055
      %v1077 = vpop.f32.mrf.mxu0
      %v1078 = vadd.f32 %v1034, %v1077
      %v1079 = vpop.f32.mrf.mxu0
      %v1080 = vadd.f32 %v1039, %v1079
      %1081 = vdwg.mxu0
      %1082 = vmatpush.bf16.msra.mxu0 0
      %1083 = vmatpush.bf16.msra.mxu0 0
      %1084 = vmatpush.bf16.msra.mxu0 0
      %1085 = vmatpush.bf16.msra.mxu0 0
      %1086 = vmatpush.bf16.msra.mxu0 0
      %1087 = vmatpush.bf16.msra.mxu0 0
      %1088 = vmatpush.bf16.msra.mxu0 0
      %1089 = vmatpush.bf16.msra.mxu0 %v1061
      %1090 = vmatmul.bf16.gmra.mxu0 %v1052
      %v1091 = vpop.f32.mrf.mxu0
      %v1092 = vadd.f32 %v1024, %v1091
      %v1093 = vpop.f32.mrf.mxu0
      %v1094 = vadd.f32 %v1029, %v1093
      %1095 = vmatmul.bf16.gmra.mxu0 %v1055
      %v1096 = vpop.f32.mrf.mxu0
      %v1097 = vadd.f32 %v1034, %v1096
      %v1098 = vpop.f32.mrf.mxu0
      %v1099 = vadd.f32 %v1039, %v1098
      %1100 = vdwg.mxu0
      %v1101 = vmax.f32 %v1073, 0.0
      %v1102 = vmax.f32 %v1092, 0.0
      %v1103 = vmax.f32 %v1075, 0.0
      %v1104 = vmax.f32 %v1094, 0.0
      %v1105 = vmax.f32 %v1078, 0.0
      %v1106 = vmax.f32 %v1097, 0.0
      %v1107 = vmax.f32 %v1080, 0.0
      %v1108 = vmax.f32 %v1099, 0.0
      %v1109 = vpack.c.bf16 %v1103, %v1101
      %v1110 = vpack.c.bf16 %v1104, %v1102
      %v1111 = vpack.c.bf16 %v1107, %v1105
      %v1112 = vpack.c.bf16 %v1108, %v1106
      %1114 = vset.pattern.permute.xlu0 0
      %1115 = vperm.xlu0 %1114, %v1017
      %v1116 = vpop.permute.xlu0 %1115
      %1119 = vset.pattern.permute.xlu0 0
      %1120 = vperm.xlu0 %1119, %v1018
      %v1121 = vpop.permute.xlu0 %1120
      %v1125 = vunpack.c.l.b16 %v1014
      %v1126 = vunpack.c.l.b16 %v1015
      %v1127 = vpack.c.b16 %v1126, %v1125
      %v1129 = vsel %vm687, %v1127, 0
      %1131 = vmatpush.bf16.msra.mxu0 0
      %1132 = vmatpush.bf16.msra.mxu0 0
      %1133 = vmatpush.bf16.msra.mxu0 0
      %1134 = vmatpush.bf16.msra.mxu0 0
      %1135 = vmatpush.bf16.msra.mxu0 0
      %1136 = vmatpush.bf16.msra.mxu0 0
      %1137 = vmatpush.bf16.msra.mxu0 %v1111
      %1138 = vmatpush.bf16.msra.mxu0 %v1109
      %1139 = vmatmul.bf16.gmra.mxu0 %v1129
      %v1140 = vpop.f32.mrf.mxu0
      %v1141 = vadd.f32 %v1116, %v1140
      %v1142 = vpop.f32.mrf.mxu0
      %v1143 = vadd.f32 %v1121, %v1142
      %1144 = vdwg.mxu0
      %1145 = vmatpush.bf16.msra.mxu0 0
      %1146 = vmatpush.bf16.msra.mxu0 0
      %1147 = vmatpush.bf16.msra.mxu0 0
      %1148 = vmatpush.bf16.msra.mxu0 0
      %1149 = vmatpush.bf16.msra.mxu0 0
      %1150 = vmatpush.bf16.msra.mxu0 0
      %1151 = vmatpush.bf16.msra.mxu0 %v1112
      %1152 = vmatpush.bf16.msra.mxu0 %v1110
      %1153 = vmatmul.bf16.gmra.mxu0 %v1129
      %v1154 = vpop.f32.mrf.mxu0
      %v1155 = vadd.f32 %v1116, %v1154
      %v1156 = vpop.f32.mrf.mxu0
      %v1157 = vadd.f32 %v1121, %v1156
      %1158 = vdwg.mxu0
      %v1159 = vmul.f32 %v1141, 0.5
      %v1160 = vmul.f32 %v1155, 0.5
      %v1161 = vtanh.pop %v1159
      %v1162 = vtanh.pop %v1160
      %v1163 = vmul.f32 %v1161, 2.0
      %v1164 = vmul.f32 %v1162, 2.0
      %v1165 = vmul.f32 %v1163, 1.442695
      %v1166 = vpow.pop %v1165
      %v1167 = vmul.f32 %v1164, 1.442695
      %v1168 = vpow.pop %v1167
      %v1169 = vmul.f32 %v1166, %v999
      %v1170 = vmul.f32 %v1168, %v1000
      %v1171 = vadd.f32 %v1169, %v1143
      %v1172 = vadd.f32 %v1170, %v1157
      %v1173 = vadd.f32 %v901, %v1163
      %v1174 = vadd.f32 %v902, %v1164
      %s1175 = scalar_lea.vmem %s10, 16
      %v1176 = vld [vmem:[%s1175] sm:$0xf]
      %v1177 = vld [vmem:[%s1175 + $0x4] sm:$0xf]
      %v1178 = vld [vmem:[%s1175 + $0x8] sm:$0xf]
      %v1179 = vld [vmem:[%s1175 + $0xc] sm:$0xf]
      %s1180 = scalar_lea.vmem %s11, 32
      %v1181 = vld [vmem:[%s1180] sm:$0xff]
      %v1182 = vld [vmem:[%s1180 + $0x8] sm:$0xff]
      %v1183 = vld [vmem:[%s1180 + $0x10] sm:$0xff]
      %v1184 = vld [vmem:[%s1180 + $0x18] sm:$0xff]
      %s1185 = scalar_lea.vmem %s12, 8
      %v1186 = vld [vmem:[%s1185] sm:$0xf]
      %v1187 = vld [vmem:[%s1185 + $0x4] sm:$0xf]
      %s1188 = scalar_lea.vmem %s13, 16
      %v1189 = vld [vmem:[%s1188] sm:$0xff]
      %v1190 = vld [vmem:[%s1188 + $0x8] sm:$0xff]
      %v1191 = vpack.c.bf16 %v1171, %v1171
      %v1192 = vpack.c.bf16 %v1172, %v1172
      %1194 = vset.pattern.permute.xlu0 0
      %1195 = vperm.xlu0 %1194, %v1181
      %v1196 = vpop.permute.xlu0 %1195
      %1199 = vset.pattern.permute.xlu0 0
      %1200 = vperm.xlu0 %1199, %v1182
      %v1201 = vpop.permute.xlu0 %1200
      %1204 = vset.pattern.permute.xlu0 0
      %1205 = vperm.xlu0 %1204, %v1183
      %v1206 = vpop.permute.xlu0 %1205
      %1209 = vset.pattern.permute.xlu0 0
      %1210 = vperm.xlu0 %1209, %v1184
      %v1211 = vpop.permute.xlu0 %1210
      %v1217 = vunpack.c.l.b16 %v1176
      %v1218 = vunpack.c.l.b16 %v1177
      %v1219 = vunpack.c.l.b16 %v1178
      %v1220 = vunpack.c.l.b16 %v1179
      %v1221 = vpack.c.b16 %v1218, %v1217
      %v1222 = vpack.c.b16 %v1220, %v1219
      %v1224 = vsel %vm608, %v1221, 0
      %v1227 = vsel %vm608, %v1222, 0
      %v1230 = vsel %vm615, %v1191, 0
      %v1233 = vsel %vm615, %v1192, 0
      %1235 = vmatpush.bf16.msra.mxu0 0
      %1236 = vmatpush.bf16.msra.mxu0 0
      %1237 = vmatpush.bf16.msra.mxu0 0
      %1238 = vmatpush.bf16.msra.mxu0 0
      %1239 = vmatpush.bf16.msra.mxu0 0
      %1240 = vmatpush.bf16.msra.mxu0 0
      %1241 = vmatpush.bf16.msra.mxu0 0
      %1242 = vmatpush.bf16.msra.mxu0 %v1230
      %1243 = vmatmul.bf16.gmra.mxu0 %v1224
      %v1244 = vpop.f32.mrf.mxu0
      %v1245 = vadd.f32 %v1196, %v1244
      %v1246 = vpop.f32.mrf.mxu0
      %v1247 = vadd.f32 %v1201, %v1246
      %1248 = vmatmul.bf16.gmra.mxu0 %v1227
      %v1249 = vpop.f32.mrf.mxu0
      %v1250 = vadd.f32 %v1206, %v1249
      %v1251 = vpop.f32.mrf.mxu0
      %v1252 = vadd.f32 %v1211, %v1251
      %1253 = vdwg.mxu0
      %1254 = vmatpush.bf16.msra.mxu0 0
      %1255 = vmatpush.bf16.msra.mxu0 0
      %1256 = vmatpush.bf16.msra.mxu0 0
      %1257 = vmatpush.bf16.msra.mxu0 0
      %1258 = vmatpush.bf16.msra.mxu0 0
      %1259 = vmatpush.bf16.msra.mxu0 0
      %1260 = vmatpush.bf16.msra.mxu0 0
      %1261 = vmatpush.bf16.msra.mxu0 %v1233
      %1262 = vmatmul.bf16.gmra.mxu0 %v1224
      %v1263 = vpop.f32.mrf.mxu0
      %v1264 = vadd.f32 %v1196, %v1263
      %v1265 = vpop.f32.mrf.mxu0
      %v1266 = vadd.f32 %v1201, %v1265
      %1267 = vmatmul.bf16.gmra.mxu0 %v1227
      %v1268 = vpop.f32.mrf.mxu0
      %v1269 = vadd.f32 %v1206, %v1268
      %v1270 = vpop.f32.mrf.mxu0
      %v1271 = vadd.f32 %v1211, %v1270
      %1272 = vdwg.mxu0
      %v1273 = vmax.f32 %v1245, 0.0
      %v1274 = vmax.f32 %v1264, 0.0
      %v1275 = vmax.f32 %v1247, 0.0
      %v1276 = vmax.f32 %v1266, 0.0
      %v1277 = vmax.f32 %v1250, 0.0
      %v1278 = vmax.f32 %v1269, 0.0
      %v1279 = vmax.f32 %v1252, 0.0
      %v1280 = vmax.f32 %v1271, 0.0
      %v1281 = vpack.c.bf16 %v1275, %v1273
      %v1282 = vpack.c.bf16 %v1276, %v1274
      %v1283 = vpack.c.bf16 %v1279, %v1277
      %v1284 = vpack.c.bf16 %v1280, %v1278
      %1286 = vset.pattern.permute.xlu0 0
      %1287 = vperm.xlu0 %1286, %v1189
      %v1288 = vpop.permute.xlu0 %1287
      %1291 = vset.pattern.permute.xlu0 0
      %1292 = vperm.xlu0 %1291, %v1190
      %v1293 = vpop.permute.xlu0 %1292
      %v1297 = vunpack.c.l.b16 %v1186
      %v1298 = vunpack.c.l.b16 %v1187
      %v1299 = vpack.c.b16 %v1298, %v1297
      %v1301 = vsel %vm687, %v1299, 0
      %1303 = vmatpush.bf16.msra.mxu0 0
      %1304 = vmatpush.bf16.msra.mxu0 0
      %1305 = vmatpush.bf16.msra.mxu0 0
      %1306 = vmatpush.bf16.msra.mxu0 0
      %1307 = vmatpush.bf16.msra.mxu0 0
      %1308 = vmatpush.bf16.msra.mxu0 0
      %1309 = vmatpush.bf16.msra.mxu0 %v1283
      %1310 = vmatpush.bf16.msra.mxu0 %v1281
      %1311 = vmatmul.bf16.gmra.mxu0 %v1301
      %v1312 = vpop.f32.mrf.mxu0
      %v1313 = vadd.f32 %v1288, %v1312
      %v1314 = vpop.f32.mrf.mxu0
      %v1315 = vadd.f32 %v1293, %v1314
      %1316 = vdwg.mxu0
      %1317 = vmatpush.bf16.msra.mxu0 0
      %1318 = vmatpush.bf16.msra.mxu0 0
      %1319 = vmatpush.bf16.msra.mxu0 0
      %1320 = vmatpush.bf16.msra.mxu0 0
      %1321 = vmatpush.bf16.msra.mxu0 0
      %1322 = vmatpush.bf16.msra.mxu0 0
      %1323 = vmatpush.bf16.msra.mxu0 %v1284
      %1324 = vmatpush.bf16.msra.mxu0 %v1282
      %1325 = vmatmul.bf16.gmra.mxu0 %v1301
      %v1326 = vpop.f32.mrf.mxu0
      %v1327 = vadd.f32 %v1288, %v1326
      %v1328 = vpop.f32.mrf.mxu0
      %v1329 = vadd.f32 %v1293, %v1328
      %1330 = vdwg.mxu0
      %v1331 = vmul.f32 %v1313, 0.5
      %v1332 = vmul.f32 %v1327, 0.5
      %v1333 = vtanh.pop %v1331
      %v1334 = vtanh.pop %v1332
      %v1335 = vmul.f32 %v1333, 2.0
      %v1336 = vmul.f32 %v1334, 2.0
      %v1337 = vmul.f32 %v1335, 1.442695
      %v1338 = vpow.pop %v1337
      %v1339 = vmul.f32 %v1336, 1.442695
      %v1340 = vpow.pop %v1339
      %v1341 = vmul.f32 %v1338, %v1001
      %v1342 = vmul.f32 %v1340, %v1002
      %v1343 = vadd.f32 %v1341, %v1315
      %v1344 = vadd.f32 %v1342, %v1329
      %v1345 = vadd.f32 %v1173, %v1335
      %v1346 = vadd.f32 %v1174, %v1336
      %1347 = vst [vmem:[%s501] sm:$0xff] %v1171
      %1348 = vst [vmem:[%s501 + $0x8] sm:$0xff] %v1172
      %1349 = vst [vmem:[%s501 + $0x10] sm:$0xff] %v1343
      %1350 = vst [vmem:[%s501 + $0x18] sm:$0xff] %v1344
      %v1351 = vrot.slane %v1345, 4
      %v1352 = vadd.f32 %v1345, %v1351
      %v1353 = vrot.slane %v1352, 2
      %v1354 = vadd.f32 %v1352, %v1353
      %v1355 = vrot.slane %v1354, 1
      %v1356 = vadd.f32 %v1354, %v1355
      %v1357 = vrot.slane %v1346, 4
      %v1358 = vadd.f32 %v1346, %v1357
      %v1359 = vrot.slane %v1358, 2
      %v1360 = vadd.f32 %v1358, %v1359
      %v1361 = vrot.slane %v1360, 1
      %v1362 = vadd.f32 %v1360, %v1361
      %v1365 = vrot.slane %v1362, 7
      %vm1366 = vcmask 1040384
      %v1367 = vsel %vm1366, %v1356, %v1365
      %v1369 = vlaneseq
      %vm1370 = vcmp.ge.s32.totalorder %v1369, 0
      %vm1371 = vcmp.lt.s32.totalorder %v1369, 256
      %vm1372 = vmand %vm1370, %vm1371
      %1373 = vst.msk [vmem:[%s505] sm:$0x3] %vm1372, %v1367
      %p1374 = scmp.lt.s32.totalorder %s27, 1
      %s1375 = scalar_select %p1374, %s27, 1
      %s1376 = smul.addr %s1375, 4
      %s1377 = smul.addr %s1376, 8
      %s1378 = scalar_lea.vmem %s14, %s1377
      %p1379 = scmp.lt.s32.totalorder %s27, 1
      %s1380 = scalar_select %p1379, %s27, 1
      %s1381 = smul.addr %s1380, 2
      %s1382 = scalar_lea.vmem %s15, %s1381
      // Predicated region
      $region77: #{flow_block_forward.1} parent=75 // pred_check
        %p1383 = pneg %p344
      $region78: #{flow_block_forward.1} parent=75 // pred_check_branch
        %1385 = sbr.rel (%p1383) target = $region80
      $region79: #{flow_block_forward.1} parent=75 // pred_region
        _
      $region80: #{flow_block_forward.1} parent=75 // pred_fallthru
        _
      // Predicated region
      $region81: #{flow_block_forward.1} parent=75 // pred_check
        %p1386 = pneg %p370
      $region82: #{flow_block_forward.1} parent=75 // pred_check_branch
        %1388 = sbr.rel (%p1386) target = $region84
      $region83: #{flow_block_forward.1} parent=75 // pred_region
        _
      $region84: #{flow_block_forward.1} parent=75 // pred_fallthru
        _
    $region76: #{flow_block_forward.1} parent=5 // pred_fallthru
      _
    %p1389 = scmp.le.s32.totalorder 2, %s22
    // Predicated region
    $region85: #{flow_block_forward.1} parent=5 // pred_check
      %p1390 = pneg %p1389
    $region86: #{flow_block_forward.1} parent=5 // pred_check_branch
      %1392 = sbr.rel (%p1390) target = $region88
    $region87: #{flow_block_forward.1} parent=5 // pred_region
      %s1393 = ssub.s32 %s22, 2
      // Predicated region
      $region89: #{flow_block_forward.1} parent=87 // pred_check
        %p1394 = pneg %p350
      $region90: #{flow_block_forward.1} parent=87 // pred_check_branch
        %1396 = sbr.rel (%p1394) target = $region92
      $region91: #{flow_block_forward.1} parent=87 // pred_region
        %p1397 = scmp.lt.s32.totalorder %s28, 1
        %s1398 = scalar_select %p1397, %s28, 1
        %s1399 = smul.addr %s1398, 4
        %s1400 = smul.addr %s1399, 8
        %s1401 = scalar_lea.vmem %s14, %s1400
      $region92: #{flow_block_forward.1} parent=87 // pred_fallthru
        _
      // Predicated region
      $region93: #{flow_block_forward.1} parent=87 // pred_check
        %p1402 = pneg %p376
      $region94: #{flow_block_forward.1} parent=87 // pred_check_branch
        %1404 = sbr.rel (%p1402) target = $region96
      $region95: #{flow_block_forward.1} parent=87 // pred_region
        %p1405 = scmp.lt.s32.totalorder %s28, 1
        %s1406 = scalar_select %p1405, %s28, 1
        %s1407 = smul.addr %s1406, 2
        %s1408 = scalar_lea.vmem %s15, %s1407
      $region96: #{flow_block_forward.1} parent=87 // pred_fallthru
        _
    $region88: #{flow_block_forward.1} parent=5 // pred_fallthru
      _
  $region6: #{flow_block_forward.1} parent=0 // loop_footer
    %s26 = sadd.s32 1, %s22
  $region7: #{flow_block_forward.1} parent=0 // loop_footer_branch
    %21 = sbr.rel target = $region3
  $region8: #{flow_block_forward.1} parent=0 // loop_exit
    _

</llo_original>
